<compile_context>
chip_gen: v6e
topology: v6e:2x2x1
jax: 0.10.0
libtpu: 0.0.40
codegen_flags: <defaults>
</compile_context>

<pallas_src>
import functools
import math

import jax
import jax.numpy as jnp
from jax.experimental import pallas as pl
from jax.experimental.pallas import tpu as pltpu

# ----------------------------- problem sizes --------------------------------
IN_FEATURES = 32
OUT_FEATURES = 48
GRID_SIZE = 5
SPLINE_ORDER = 3
GRID_RANGE = (-1.0, 1.0)
BATCH = 64

N_GRID = GRID_SIZE + 2 * SPLINE_ORDER + 1   # knots per feature (12)
N_BASES = GRID_SIZE + SPLINE_ORDER          # B-spline bases per feature (8)


# ------------------------------- kernel -------------------------------------
def kan_linear_kernel(x_ref, consts_ref, w_ref, out_ref, xt_scr, b_scr, *,
                      in_features, spline_order, n_bases):
    F = in_features
    nb0 = b_scr.shape[1] // F          # n_grid - 1 (degree-0 basis count)
    kb = n_bases * F                   # spline part of the fused K dimension

    x = x_ref[...]                     # (TB, F) f32

    # Replicate x across the nb0 lane-packed basis blocks: xt[:, j*F+f] = x[:, f].
    for j in range(nb0):
        xt_scr[:, j * F:(j + 1) * F] = x

    # Degree-0 bases: indicator of the knot interval, computed at full lane width.
    xt = xt_scr[...]
    lo0 = consts_ref[0:1, :]           # knot_j      (lane-packed)
    hi0 = consts_ref[1:2, :]           # knot_{j+1}  (lane-packed)
    b_scr[...] = jnp.where((xt >= lo0) & (xt < hi0), 1.0, 0.0)

    # Cox-de Boor degree raising, in place on the lane-packed slab.
    # c1 = (x - t_j) / (t_{j+k} - t_j),  c2 = (t_{j+k+1} - x) / (t_{j+k+1} - t_{j+1})
    # expressed as x * a + b with reciprocal denominators precomputed in the wrapper.
    for k in range(1, spline_order + 1):
        wk = (nb0 - k) * F
        r = 2 + 4 * (k - 1)
        xw = xt_scr[:, :wk]
        c1 = xw * consts_ref[r + 0:r + 1, :wk] + consts_ref[r + 1:r + 2, :wk]
        c2 = xw * consts_ref[r + 2:r + 3, :wk] + consts_ref[r + 3:r + 4, :wk]
        b_scr[:, :wk] = c1 * b_scr[:, :wk] + c2 * b_scr[:, F:F + wk]

    # Base path: SiLU(x) appended right after the final bases (lanes kb:kb+F).
    # Written AFTER the recursion because level-k reads extend past lane kb.
    b_scr[:, kb:kb + F] = x * (1.0 / (1.0 + jnp.exp(-x)))

    # One fused MXU contraction: [bases | silu(x)] @ [scaled_spline_w ; base_w^T].
    out_ref[...] = jnp.dot(b_scr[:, :kb + F], w_ref[...],
                           preferred_element_type=jnp.float32
                           ).astype(out_ref.dtype)


# ------------------------------- wrapper -------------------------------------
def kan_linear(x, grid, base_weight, spline_weight, spline_scaler,
               *, spline_order=SPLINE_ORDER, tile_b=None):
    f32 = jnp.float32
    B, F = x.shape
    O = base_weight.shape[0]
    n_grid = grid.shape[1]
    n_bases = spline_weight.shape[2]
    nb0 = n_grid - 1
    assert nb0 == n_bases + spline_order
    if tile_b is None:
        tile_b = B if B <= 128 else 128          # whole batch in one block here
    assert B % tile_b == 0 and tile_b % 8 == 0

    o_pad = ((O + 127) // 128) * 128             # lane-dense output width
    g = grid.astype(f32)                         # (F, n_grid)

    # --- lane-packed constant rows: packed index j*F + f  <-  a[f, j] ---
    def lane_pack(a):                            # a: (F, m)
        m = a.shape[1]
        row = a.T.reshape(1, m * F)
        if m < nb0:
            row = jnp.concatenate(
                [row, jnp.zeros((1, (nb0 - m) * F), f32)], axis=1)
        return row

    rows = [lane_pack(g[:, :nb0]),               # lo0 = t_j
            lane_pack(g[:, 1:nb0 + 1])]          # hi0 = t_{j+1}
    for k in range(1, spline_order + 1):
        m = nb0 - k
        r1 = 1.0 / (g[:, k:k + m] - g[:, 0:m])                 # 1/(t_{j+k}-t_j)
        r2 = 1.0 / (g[:, k + 1:k + 1 + m] - g[:, 1:1 + m])     # 1/(t_{j+k+1}-t_{j+1})
        rows += [lane_pack(r1),                                # a1
                 lane_pack(-g[:, 0:m] * r1),                   # b1
                 lane_pack(-r2),                               # a2
                 lane_pack(g[:, k + 1:k + 1 + m] * r2)]        # b2
    consts = jnp.concatenate(rows, axis=0).astype(f32)         # (2+4*so, nb0*F)

    # --- fused weight: scaler folded in, base weight appended, O padded ---
    scaled_sw = (spline_weight * spline_scaler[:, :, None]).astype(f32)   # (O,F,nb)
    sw_k = jnp.transpose(scaled_sw, (2, 1, 0)).reshape(n_bases * F, O)    # row j*F+f
    w_big = jnp.concatenate([sw_k, base_weight.T.astype(f32)], axis=0)    # (nb*F+F, O)
    w_big = jnp.pad(w_big, ((0, 0), (0, o_pad - O)))

    kernel = functools.partial(kan_linear_kernel, in_features=F,
                               spline_order=spline_order, n_bases=n_bases)
    out = pl.pallas_call(
        kernel,
        out_shape=jax.ShapeDtypeStruct((B, o_pad), f32),
        grid_spec=pltpu.PrefetchScalarGridSpec(
            num_scalar_prefetch=0,
            grid=(B // tile_b,),
            in_specs=[
                pl.BlockSpec((tile_b, F), lambda i: (i, 0)),      # x tile
                pl.BlockSpec(consts.shape, lambda i: (0, 0)),     # packed constants
                pl.BlockSpec(w_big.shape, lambda i: (0, 0)),      # fused weight
            ],
            out_specs=pl.BlockSpec((tile_b, o_pad), lambda i: (i, 0)),
            scratch_shapes=[
                pltpu.VMEM((tile_b, nb0 * F), f32),   # xt: x replicated per basis
                pltpu.VMEM((tile_b, nb0 * F), f32),   # bases slab (in-place levels)
            ],
        ),
        compiler_params=pltpu.CompilerParams(
            dimension_semantics=("parallel",)),
    )(x.astype(f32), consts, w_big)
    return out[:, :O]


# --------------------------- reference (pure JAX) ----------------------------
def kan_linear_ref(x, grid, base_weight, spline_weight, spline_scaler, spline_order):
    g = grid                                              # (F, n_grid)
    xx = x[:, :, None]
    bases = ((xx >= g[None, :, :-1]) & (xx < g[None, :, 1:])).astype(x.dtype)
    for k in range(1, spline_order + 1):
        bases = ((xx - g[None, :, :-(k + 1)])
                 / (g[None, :, k:-1] - g[None, :, :-(k + 1)]) * bases[:, :, :-1]
                 + (g[None, :, k + 1:] - xx)
                 / (g[None, :, k + 1:] - g[None, :, 1:-k]) * bases[:, :, 1:])
    base_out = (x * (1.0 / (1.0 + jnp.exp(-x)))) @ base_weight.T
    scaled = spline_weight * spline_scaler[:, :, None]
    spline_out = bases.reshape(x.shape[0], -1) @ scaled.reshape(scaled.shape[0], -1).T
    return base_out + spline_out


# ------------------------ deterministic parameter init -----------------------
def init_params(key, in_features, out_features, grid_size, spline_order, grid_range):
    h = (grid_range[1] - grid_range[0]) / grid_size
    knots = (jnp.arange(-spline_order, grid_size + spline_order + 1,
                        dtype=jnp.float32) * h + grid_range[0])
    grid = jnp.tile(knots[None, :], (in_features, 1))     # (F, n_grid)

    k1, k2, k3 = jax.random.split(key, 3)
    bound = 1.0 / math.sqrt(in_features)                  # kaiming_uniform bound
    base_weight = jax.random.uniform(
        k1, (out_features, in_features), jnp.float32, -bound, bound)
    spline_weight = 0.1 * jax.random.uniform(
        k2, (out_features, in_features, grid_size + spline_order),
        jnp.float32, -1.0, 1.0)
    spline_scaler = jax.random.uniform(
        k3, (out_features, in_features), jnp.float32, -bound, bound)
    return grid, base_weight, spline_weight, spline_scaler


# --------------------------------- main --------------------------------------
if __name__ == "__main__":
    key = jax.random.PRNGKey(0)
    kx, kp = jax.random.split(key)

    grid, base_weight, spline_weight, spline_scaler = init_params(
        kp, IN_FEATURES, OUT_FEATURES, GRID_SIZE, SPLINE_ORDER, GRID_RANGE)

    x = jax.random.uniform(kx, (BATCH, IN_FEATURES), jnp.float32, -1.0, 1.0)

    out = kan_linear(x, grid, base_weight, spline_weight, spline_scaler)
    out = jax.block_until_ready(out)

    ref = kan_linear_ref(x, grid, base_weight, spline_weight, spline_scaler,
                         SPLINE_ORDER)
    assert out.shape == (BATCH, OUT_FEATURES)
    err = float(jnp.max(jnp.abs(out - ref)))
    assert jnp.allclose(out, ref, atol=2e-5, rtol=2e-5), f"max abs err {err}"

    print("KERNEL_OK")
</pallas_src>

<mosaic_0001>
module attributes {stable_mosaic.version = 11 : i64} {
  func.func @kan_linear_kernel(%arg0: i32, %arg1: memref<64x32xf32, #tpu.memory_space<vmem>>, %arg2: memref<14x352xf32, #tpu.memory_space<vmem>>, %arg3: memref<288x128xf32, #tpu.memory_space<vmem>>, %arg4: memref<64x128xf32, #tpu.memory_space<vmem>>, %arg5: memref<64x352xf32, #tpu.memory_space<vmem>>, %arg6: memref<64x352xf32, #tpu.memory_space<vmem>>) attributes {dimension_semantics = [#tpu.dimension_semantics<parallel>], iteration_bounds = array<i64: 1>, scalar_prefetch = 0 : i64, scratch_operands = 2 : i64, tpu.core_type = #tpu.core_type<tc>, window_params = [{transform_indices = @transform_0, window_bounds = array<i64: 64, 32>}, {pipeline_mode = #tpu.pipeline_mode<synchronous>, transform_indices = @transform_1, window_bounds = array<i64: 14, 352>}, {pipeline_mode = #tpu.pipeline_mode<synchronous>, transform_indices = @transform_2, window_bounds = array<i64: 288, 128>}, {transform_indices = @transform_3, window_bounds = array<i64: 64, 128>}]} {
    %c0 = arith.constant 0 : index
    %c0_0 = arith.constant 0 : index
    %0 = vector.load %arg1[%c0, %c0_0] : memref<64x32xf32, #tpu.memory_space<vmem>>, vector<64x32xf32>
    %c0_1 = arith.constant 0 : index
    %c0_2 = arith.constant 0 : index
    %1 = vector.load %arg5[%c0_1, %c0_2] : memref<64x352xf32, #tpu.memory_space<vmem>>, vector<64x32xf32>
    tpu.vector_store %arg5[%c0_1, %c0_2], %0 {strides = array<i32>} : memref<64x352xf32, #tpu.memory_space<vmem>>, vector<64x32xf32>,
    %c0_3 = arith.constant 0 : index
    %c32 = arith.constant 32 : index
    %2 = vector.load %arg5[%c0_3, %c32] : memref<64x352xf32, #tpu.memory_space<vmem>>, vector<64x32xf32>
    tpu.vector_store %arg5[%c0_3, %c32], %0 {strides = array<i32>} : memref<64x352xf32, #tpu.memory_space<vmem>>, vector<64x32xf32>,
    %c0_4 = arith.constant 0 : index
    %c64 = arith.constant 64 : index
    %3 = vector.load %arg5[%c0_4, %c64] : memref<64x352xf32, #tpu.memory_space<vmem>>, vector<64x32xf32>
    tpu.vector_store %arg5[%c0_4, %c64], %0 {strides = array<i32>} : memref<64x352xf32, #tpu.memory_space<vmem>>, vector<64x32xf32>,
    %c0_5 = arith.constant 0 : index
    %c96 = arith.constant 96 : index
    %4 = vector.load %arg5[%c0_5, %c96] : memref<64x352xf32, #tpu.memory_space<vmem>>, vector<64x32xf32>
    tpu.vector_store %arg5[%c0_5, %c96], %0 {strides = array<i32>} : memref<64x352xf32, #tpu.memory_space<vmem>>, vector<64x32xf32>,
    %c0_6 = arith.constant 0 : index
    %c128 = arith.constant 128 : index
    %5 = vector.load %arg5[%c0_6, %c128] : memref<64x352xf32, #tpu.memory_space<vmem>>, vector<64x32xf32>
    tpu.vector_store %arg5[%c0_6, %c128], %0 {strides = array<i32>} : memref<64x352xf32, #tpu.memory_space<vmem>>, vector<64x32xf32>,
    %c0_7 = arith.constant 0 : index
    %c160 = arith.constant 160 : index
    %6 = vector.load %arg5[%c0_7, %c160] : memref<64x352xf32, #tpu.memory_space<vmem>>, vector<64x32xf32>
    tpu.vector_store %arg5[%c0_7, %c160], %0 {strides = array<i32>} : memref<64x352xf32, #tpu.memory_space<vmem>>, vector<64x32xf32>,
    %c0_8 = arith.constant 0 : index
    %c192 = arith.constant 192 : index
    %7 = vector.load %arg5[%c0_8, %c192] : memref<64x352xf32, #tpu.memory_space<vmem>>, vector<64x32xf32>
    tpu.vector_store %arg5[%c0_8, %c192], %0 {strides = array<i32>} : memref<64x352xf32, #tpu.memory_space<vmem>>, vector<64x32xf32>,
    %c0_9 = arith.constant 0 : index
    %c224 = arith.constant 224 : index
    %8 = vector.load %arg5[%c0_9, %c224] : memref<64x352xf32, #tpu.memory_space<vmem>>, vector<64x32xf32>
    tpu.vector_store %arg5[%c0_9, %c224], %0 {strides = array<i32>} : memref<64x352xf32, #tpu.memory_space<vmem>>, vector<64x32xf32>,
    %c0_10 = arith.constant 0 : index
    %c256 = arith.constant 256 : index
    %9 = vector.load %arg5[%c0_10, %c256] : memref<64x352xf32, #tpu.memory_space<vmem>>, vector<64x32xf32>
    tpu.vector_store %arg5[%c0_10, %c256], %0 {strides = array<i32>} : memref<64x352xf32, #tpu.memory_space<vmem>>, vector<64x32xf32>,
    %c0_11 = arith.constant 0 : index
    %c288 = arith.constant 288 : index
    %10 = vector.load %arg5[%c0_11, %c288] : memref<64x352xf32, #tpu.memory_space<vmem>>, vector<64x32xf32>
    tpu.vector_store %arg5[%c0_11, %c288], %0 {strides = array<i32>} : memref<64x352xf32, #tpu.memory_space<vmem>>, vector<64x32xf32>,
    %c0_12 = arith.constant 0 : index
    %c320 = arith.constant 320 : index
    %11 = vector.load %arg5[%c0_12, %c320] : memref<64x352xf32, #tpu.memory_space<vmem>>, vector<64x32xf32>
    tpu.vector_store %arg5[%c0_12, %c320], %0 {strides = array<i32>} : memref<64x352xf32, #tpu.memory_space<vmem>>, vector<64x32xf32>,
    %c0_13 = arith.constant 0 : index
    %c0_14 = arith.constant 0 : index
    %12 = vector.load %arg5[%c0_13, %c0_14] : memref<64x352xf32, #tpu.memory_space<vmem>>, vector<64x352xf32>
    %c0_15 = arith.constant 0 : index
    %c0_16 = arith.constant 0 : index
    %13 = vector.load %arg2[%c0_15, %c0_16] : memref<14x352xf32, #tpu.memory_space<vmem>>, vector<1x352xf32>
    %c1 = arith.constant 1 : index
    %c0_17 = arith.constant 0 : index
    %14 = vector.load %arg2[%c1, %c0_17] : memref<14x352xf32, #tpu.memory_space<vmem>>, vector<1x352xf32>
    %15 = vector.broadcast %13 : vector<1x352xf32> to vector<64x352xf32>
    %16 = arith.cmpf oge, %12, %15 : vector<64x352xf32>
    %17 = vector.broadcast %14 : vector<1x352xf32> to vector<64x352xf32>
    %18 = arith.cmpf olt, %12, %17 : vector<64x352xf32>
    %19 = arith.andi %16, %18 : vector<64x352xi1>
    %cst = arith.constant 1.000000e+00 : f32
    %cst_18 = arith.constant 0.000000e+00 : f32
    %20 = vector.broadcast %cst : f32 to vector<64x352xf32>
    %21 = vector.broadcast %cst_18 : f32 to vector<64x352xf32>
    %22 = arith.select %19, %20, %21 : vector<64x352xi1>, vector<64x352xf32>
    %c0_19 = arith.constant 0 : index
    %c0_20 = arith.constant 0 : index
    %23 = vector.load %arg6[%c0_19, %c0_20] : memref<64x352xf32, #tpu.memory_space<vmem>>, vector<64x352xf32>
    tpu.vector_store %arg6[%c0_19, %c0_20], %22 {strides = array<i32>} : memref<64x352xf32, #tpu.memory_space<vmem>>, vector<64x352xf32>,
    %c0_21 = arith.constant 0 : index
    %c0_22 = arith.constant 0 : index
    %24 = vector.load %arg5[%c0_21, %c0_22] : memref<64x352xf32, #tpu.memory_space<vmem>>, vector<64x320xf32>
    %c2 = arith.constant 2 : index
    %c0_23 = arith.constant 0 : index
    %25 = vector.load %arg2[%c2, %c0_23] : memref<14x352xf32, #tpu.memory_space<vmem>>, vector<1x320xf32>
    %26 = vector.broadcast %25 : vector<1x320xf32> to vector<64x320xf32>
    %27 = arith.mulf %24, %26 : vector<64x320xf32>
    %c3 = arith.constant 3 : index
    %c0_24 = arith.constant 0 : index
    %28 = vector.load %arg2[%c3, %c0_24] : memref<14x352xf32, #tpu.memory_space<vmem>>, vector<1x320xf32>
    %29 = vector.broadcast %28 : vector<1x320xf32> to vector<64x320xf32>
    %30 = arith.addf %27, %29 : vector<64x320xf32>
    %c4 = arith.constant 4 : index
    %c0_25 = arith.constant 0 : index
    %31 = vector.load %arg2[%c4, %c0_25] : memref<14x352xf32, #tpu.memory_space<vmem>>, vector<1x320xf32>
    %32 = vector.broadcast %31 : vector<1x320xf32> to vector<64x320xf32>
    %33 = arith.mulf %24, %32 : vector<64x320xf32>
    %c5 = arith.constant 5 : index
    %c0_26 = arith.constant 0 : index
    %34 = vector.load %arg2[%c5, %c0_26] : memref<14x352xf32, #tpu.memory_space<vmem>>, vector<1x320xf32>
    %35 = vector.broadcast %34 : vector<1x320xf32> to vector<64x320xf32>
    %36 = arith.addf %33, %35 : vector<64x320xf32>
    %c0_27 = arith.constant 0 : index
    %c0_28 = arith.constant 0 : index
    %37 = vector.load %arg6[%c0_27, %c0_28] : memref<64x352xf32, #tpu.memory_space<vmem>>, vector<64x320xf32>
    %38 = arith.mulf %30, %37 : vector<64x320xf32>
    %c0_29 = arith.constant 0 : index
    %c32_30 = arith.constant 32 : index
    %39 = vector.load %arg6[%c0_29, %c32_30] : memref<64x352xf32, #tpu.memory_space<vmem>>, vector<64x320xf32>
    %40 = arith.mulf %36, %39 : vector<64x320xf32>
    %41 = arith.addf %38, %40 : vector<64x320xf32>
    %c0_31 = arith.constant 0 : index
    %c0_32 = arith.constant 0 : index
    %42 = vector.load %arg6[%c0_31, %c0_32] : memref<64x352xf32, #tpu.memory_space<vmem>>, vector<64x320xf32>
    tpu.vector_store %arg6[%c0_31, %c0_32], %41 {strides = array<i32>} : memref<64x352xf32, #tpu.memory_space<vmem>>, vector<64x320xf32>,
    %c0_33 = arith.constant 0 : index
    %c0_34 = arith.constant 0 : index
    %43 = vector.load %arg5[%c0_33, %c0_34] : memref<64x352xf32, #tpu.memory_space<vmem>>, vector<64x288xf32>
    %c6 = arith.constant 6 : index
    %c0_35 = arith.constant 0 : index
    %44 = vector.load %arg2[%c6, %c0_35] : memref<14x352xf32, #tpu.memory_space<vmem>>, vector<1x288xf32>
    %45 = vector.broadcast %44 : vector<1x288xf32> to vector<64x288xf32>
    %46 = arith.mulf %43, %45 : vector<64x288xf32>
    %c7 = arith.constant 7 : index
    %c0_36 = arith.constant 0 : index
    %47 = vector.load %arg2[%c7, %c0_36] : memref<14x352xf32, #tpu.memory_space<vmem>>, vector<1x288xf32>
    %48 = vector.broadcast %47 : vector<1x288xf32> to vector<64x288xf32>
    %49 = arith.addf %46, %48 : vector<64x288xf32>
    %c8 = arith.constant 8 : index
    %c0_37 = arith.constant 0 : index
    %50 = vector.load %arg2[%c8, %c0_37] : memref<14x352xf32, #tpu.memory_space<vmem>>, vector<1x288xf32>
    %51 = vector.broadcast %50 : vector<1x288xf32> to vector<64x288xf32>
    %52 = arith.mulf %43, %51 : vector<64x288xf32>
    %c9 = arith.constant 9 : index
    %c0_38 = arith.constant 0 : index
    %53 = vector.load %arg2[%c9, %c0_38] : memref<14x352xf32, #tpu.memory_space<vmem>>, vector<1x288xf32>
    %54 = vector.broadcast %53 : vector<1x288xf32> to vector<64x288xf32>
    %55 = arith.addf %52, %54 : vector<64x288xf32>
    %c0_39 = arith.constant 0 : index
    %c0_40 = arith.constant 0 : index
    %56 = vector.load %arg6[%c0_39, %c0_40] : memref<64x352xf32, #tpu.memory_space<vmem>>, vector<64x288xf32>
    %57 = arith.mulf %49, %56 : vector<64x288xf32>
    %c0_41 = arith.constant 0 : index
    %c32_42 = arith.constant 32 : index
    %58 = vector.load %arg6[%c0_41, %c32_42] : memref<64x352xf32, #tpu.memory_space<vmem>>, vector<64x288xf32>
    %59 = arith.mulf %55, %58 : vector<64x288xf32>
    %60 = arith.addf %57, %59 : vector<64x288xf32>
    %c0_43 = arith.constant 0 : index
    %c0_44 = arith.constant 0 : index
    %61 = vector.load %arg6[%c0_43, %c0_44] : memref<64x352xf32, #tpu.memory_space<vmem>>, vector<64x288xf32>
    tpu.vector_store %arg6[%c0_43, %c0_44], %60 {strides = array<i32>} : memref<64x352xf32, #tpu.memory_space<vmem>>, vector<64x288xf32>,
    %c0_45 = arith.constant 0 : index
    %c0_46 = arith.constant 0 : index
    %62 = vector.load %arg5[%c0_45, %c0_46] : memref<64x352xf32, #tpu.memory_space<vmem>>, vector<64x256xf32>
    %c10 = arith.constant 10 : index
    %c0_47 = arith.constant 0 : index
    %63 = vector.load %arg2[%c10, %c0_47] : memref<14x352xf32, #tpu.memory_space<vmem>>, vector<1x256xf32>
    %64 = vector.broadcast %63 : vector<1x256xf32> to vector<64x256xf32>
    %65 = arith.mulf %62, %64 : vector<64x256xf32>
    %c11 = arith.constant 11 : index
    %c0_48 = arith.constant 0 : index
    %66 = vector.load %arg2[%c11, %c0_48] : memref<14x352xf32, #tpu.memory_space<vmem>>, vector<1x256xf32>
    %67 = vector.broadcast %66 : vector<1x256xf32> to vector<64x256xf32>
    %68 = arith.addf %65, %67 : vector<64x256xf32>
    %c12 = arith.constant 12 : index
    %c0_49 = arith.constant 0 : index
    %69 = vector.load %arg2[%c12, %c0_49] : memref<14x352xf32, #tpu.memory_space<vmem>>, vector<1x256xf32>
    %70 = vector.broadcast %69 : vector<1x256xf32> to vector<64x256xf32>
    %71 = arith.mulf %62, %70 : vector<64x256xf32>
    %c13 = arith.constant 13 : index
    %c0_50 = arith.constant 0 : index
    %72 = vector.load %arg2[%c13, %c0_50] : memref<14x352xf32, #tpu.memory_space<vmem>>, vector<1x256xf32>
    %73 = vector.broadcast %72 : vector<1x256xf32> to vector<64x256xf32>
    %74 = arith.addf %71, %73 : vector<64x256xf32>
    %c0_51 = arith.constant 0 : index
    %c0_52 = arith.constant 0 : index
    %75 = vector.load %arg6[%c0_51, %c0_52] : memref<64x352xf32, #tpu.memory_space<vmem>>, vector<64x256xf32>
    %76 = arith.mulf %68, %75 : vector<64x256xf32>
    %c0_53 = arith.constant 0 : index
    %c32_54 = arith.constant 32 : index
    %77 = vector.load %arg6[%c0_53, %c32_54] : memref<64x352xf32, #tpu.memory_space<vmem>>, vector<64x256xf32>
    %78 = arith.mulf %74, %77 : vector<64x256xf32>
    %79 = arith.addf %76, %78 : vector<64x256xf32>
    %c0_55 = arith.constant 0 : index
    %c0_56 = arith.constant 0 : index
    %80 = vector.load %arg6[%c0_55, %c0_56] : memref<64x352xf32, #tpu.memory_space<vmem>>, vector<64x256xf32>
    tpu.vector_store %arg6[%c0_55, %c0_56], %79 {strides = array<i32>} : memref<64x352xf32, #tpu.memory_space<vmem>>, vector<64x256xf32>,
    %cst_57 = arith.constant 0.000000e+00 : f32
    %81 = vector.broadcast %cst_57 : f32 to vector<64x32xf32>
    %82 = arith.subf %81, %0 : vector<64x32xf32>
    %83 = math.exp %82 : vector<64x32xf32>
    %cst_58 = arith.constant 1.000000e+00 : f32
    %84 = vector.broadcast %cst_58 : f32 to vector<64x32xf32>
    %85 = arith.addf %84, %83 : vector<64x32xf32>
    %cst_59 = arith.constant 1.000000e+00 : f32
    %86 = vector.broadcast %cst_59 : f32 to vector<64x32xf32>
    %87 = arith.divf %86, %85 : vector<64x32xf32>
    %88 = arith.mulf %0, %87 : vector<64x32xf32>
    %c0_60 = arith.constant 0 : index
    %c256_61 = arith.constant 256 : index
    %89 = vector.load %arg6[%c0_60, %c256_61] : memref<64x352xf32, #tpu.memory_space<vmem>>, vector<64x32xf32>
    tpu.vector_store %arg6[%c0_60, %c256_61], %88 {strides = array<i32>} : memref<64x352xf32, #tpu.memory_space<vmem>>, vector<64x32xf32>,
    %c0_62 = arith.constant 0 : index
    %c0_63 = arith.constant 0 : index
    %90 = vector.load %arg6[%c0_62, %c0_63] : memref<64x352xf32, #tpu.memory_space<vmem>>, vector<64x288xf32>
    %c0_64 = arith.constant 0 : index
    %c0_65 = arith.constant 0 : index
    %91 = vector.load %arg3[%c0_64, %c0_65] : memref<288x128xf32, #tpu.memory_space<vmem>>, vector<288x128xf32>
    %cst_66 = arith.constant dense<0.000000e+00> : vector<64x128xf32>
    %92 = tpu.matmul %90, %91, %cst_66 {dimension_numbers = #tpu.dot_dimension_numbers<[1], [0], [0], [1], [0, 0, 1, 1], [], []>} : vector<64x288xf32>, vector<288x128xf32>, vector<64x128xf32> -> vector<64x128xf32>
    %c0_67 = arith.constant 0 : index
    %c0_68 = arith.constant 0 : index
    %93 = vector.load %arg4[%c0_67, %c0_68] : memref<64x128xf32, #tpu.memory_space<vmem>>, vector<64x128xf32>
    tpu.vector_store %arg4[%c0_67, %c0_68], %92 {strides = array<i32>} : memref<64x128xf32, #tpu.memory_space<vmem>>, vector<64x128xf32>,
    return
  }
  func.func @transform_0(%arg0: i32) -> (i32, i32) {
    %c0_i32 = arith.constant 0 : i32
    %c0_i32_0 = arith.constant 0 : i32
    return %arg0, %c0_i32 : i32, i32
  }
  func.func @transform_1(%arg0: i32) -> (i32, i32) {
    %c0_i32 = arith.constant 0 : i32
    %c0_i32_0 = arith.constant 0 : i32
    %c0_i32_1 = arith.constant 0 : i32
    return %c0_i32, %c0_i32_0 : i32, i32
  }
  func.func @transform_2(%arg0: i32) -> (i32, i32) {
    %c0_i32 = arith.constant 0 : i32
    %c0_i32_0 = arith.constant 0 : i32
    %c0_i32_1 = arith.constant 0 : i32
    return %c0_i32, %c0_i32_0 : i32, i32
  }
  func.func @transform_3(%arg0: i32) -> (i32, i32) {
    %c0_i32 = arith.constant 0 : i32
    %c0_i32_0 = arith.constant 0 : i32
    return %arg0, %c0_i32 : i32, i32
  }
}

</mosaic_0001>

<llo_original>
// kernel: tpu_custom_call.1
$region0: #{tpu_custom_call.1}
  #allocation0 [shape = 'u32[]', space=smem, size = 0x4, offset = 0x4, fixed_abs, tag = 'smem constant byte address 0x4 - core index']
  #allocation1 [shape = 'u32[144,128]{1,0:T(1,128)}', space=vmem, size = 0x12000, scoped, tag = 'internal scratch']
  #allocation2 [shape = 'f32[64,352]{1,0:T(8,128)}', space=vmem, size = 0x18000, scoped, tag = 'scratch operand']
  #allocation3 [shape = 'f32[64,352]{1,0:T(8,128)}', space=vmem, size = 0x18000, scoped, tag = 'scratch operand']
  %s0 = inlined_call_operand.vmem [shape: f32[64,32], index: 0, kind: input, shape index: {}]
  %s1 = inlined_call_operand.vmem [shape: f32[14,352], index: 1, kind: input, shape index: {}]
  %s2 = inlined_call_operand.hbm [shape: f32[288,128], index: 2, kind: input, shape index: {}]
  %s3 = inlined_call_operand.hbm [shape: f32[64,128], index: 3, kind: output, shape index: {}]
  %s4 = sld [smem:[#allocation0]]
  $region26: #{tpu_custom_call.1} parent=0
    _
  %s6 = ssub.s32 1, %s4
  %s7 = scalar_select 0, %s6, %s4
  $region1: #{tpu_custom_call.1} parent=0
    #allocation4 [shape = 'u8[147456]{0}', space=vmem, size = 0x24000, scoped, tag = 'input window, operand 2, single buffered']
    #allocation5 [shape = 's32[1]{0}', space=sflag, size = 0x4, scoped, tag = 'scoped memory for tpu_custom_call.1']
    #allocation6 [shape = 's32[1]{0}', space=sflag, size = 0x4, scoped, tag = 'scoped memory for tpu_custom_call.1']
    #allocation7 [shape = 'u8[32768]{0}', space=vmem, size = 0x8000, scoped, tag = 'output window, operand 0, single buffered']
    %8 = vsyncpa [#allocation5], 0
    %9 = vsyncpa [#allocation6], 0
    // Predicated region
    $region2: #{tpu_custom_call.1} parent=1 // pred_check
      _
    $region3: #{tpu_custom_call.1} parent=1 // pred_check_branch
      %11 = sbr.rel (0) target = $region5
    $region4: #{tpu_custom_call.1} parent=1 // pred_region
      _
    $region5: #{tpu_custom_call.1} parent=1 // pred_fallthru
      _
    // Predicated region
    $region6: #{tpu_custom_call.1} parent=1 // pred_check
      _
    $region7: #{tpu_custom_call.1} parent=1 // pred_check_branch
      %13 = sbr.rel (0) target = $region9
    $region8: #{tpu_custom_call.1} parent=1 // pred_region
      _
    $region9: #{tpu_custom_call.1} parent=1 // pred_fallthru
      _
    // Predicated region
    $region10: #{tpu_custom_call.1} parent=1 // pred_check
      _
    $region11: #{tpu_custom_call.1} parent=1 // pred_check_branch
      %15 = sbr.rel (0) target = $region13
    $region12: #{tpu_custom_call.1} parent=1 // pred_region
      %s17 = ssub.s32 4608, 4608
      %18 = vsyncadd [#allocation5], %s17
      %s19 = sshll.u32 [#allocation4], 4
      %s20 = int_to_ptr.vmem [resolvable:$true] %s19
      %25 = dma.hbm_to_vmem [thread:$0]  %s2, 4608, %s20, [#allocation5], 128, 128, 8
    $region13: #{tpu_custom_call.1} parent=1 // pred_fallthru
      _
    // Predicated region
    $region14: #{tpu_custom_call.1} parent=1 // pred_check
      _
    $region15: #{tpu_custom_call.1} parent=1 // pred_check_branch
      %27 = sbr.rel (0) target = $region17
    $region16: #{tpu_custom_call.1} parent=1 // pred_region
      %28 = dma.done [#allocation5], 4608
    $region17: #{tpu_custom_call.1} parent=1 // pred_fallthru
      _
    %v29 = vld [vmem:[%s0] sm:$0xff]
    %v30 = vld [vmem:[%s0 + $0x8] sm:$0xff]
    %v31 = vld [vmem:[%s0 + $0x10] sm:$0xff]
    %v32 = vld [vmem:[%s0 + $0x18] sm:$0xff]
    %v33 = vld [vmem:[%s0 + $0x20] sm:$0xff]
    %v34 = vld [vmem:[%s0 + $0x28] sm:$0xff]
    %v35 = vld [vmem:[%s0 + $0x30] sm:$0xff]
    %v36 = vld [vmem:[%s0 + $0x38] sm:$0xff]
    %vm37 = vcmask 261120
    %38 = vst.msk [vmem:[#allocation2] sm:$0xff] %vm37, %v29
    %39 = vst.msk [vmem:[#allocation2 + $0x18] sm:$0xff] %vm37, %v30
    %40 = vst.msk [vmem:[#allocation2 + $0x30] sm:$0xff] %vm37, %v31
    %41 = vst.msk [vmem:[#allocation2 + $0x48] sm:$0xff] %vm37, %v32
    %42 = vst.msk [vmem:[#allocation2 + $0x60] sm:$0xff] %vm37, %v33
    %43 = vst.msk [vmem:[#allocation2 + $0x78] sm:$0xff] %vm37, %v34
    %44 = vst.msk [vmem:[#allocation2 + $0x90] sm:$0xff] %vm37, %v35
    %45 = vst.msk [vmem:[#allocation2 + $0xa8] sm:$0xff] %vm37, %v36
    %54 = vrot.lane.b32.xlu0 %v29, 32
    %v55 = vpop.permute.xlu0 %54
    %56 = vrot.lane.b32.xlu0 %v30, 32
    %v57 = vpop.permute.xlu0 %56
    %58 = vrot.lane.b32.xlu0 %v31, 32
    %v59 = vpop.permute.xlu0 %58
    %60 = vrot.lane.b32.xlu0 %v32, 32
    %v61 = vpop.permute.xlu0 %60
    %62 = vrot.lane.b32.xlu0 %v33, 32
    %v63 = vpop.permute.xlu0 %62
    %64 = vrot.lane.b32.xlu0 %v34, 32
    %v65 = vpop.permute.xlu0 %64
    %66 = vrot.lane.b32.xlu0 %v35, 32
    %v67 = vpop.permute.xlu0 %66
    %68 = vrot.lane.b32.xlu0 %v36, 32
    %v69 = vpop.permute.xlu0 %68
    %vm78 = vcmask 523520
    %79 = vst.msk [vmem:[#allocation2] sm:$0xff] %vm78, %v55
    %80 = vst.msk [vmem:[#allocation2 + $0x18] sm:$0xff] %vm78, %v57
    %81 = vst.msk [vmem:[#allocation2 + $0x30] sm:$0xff] %vm78, %v59
    %82 = vst.msk [vmem:[#allocation2 + $0x48] sm:$0xff] %vm78, %v61
    %83 = vst.msk [vmem:[#allocation2 + $0x60] sm:$0xff] %vm78, %v63
    %84 = vst.msk [vmem:[#allocation2 + $0x78] sm:$0xff] %vm78, %v65
    %85 = vst.msk [vmem:[#allocation2 + $0x90] sm:$0xff] %vm78, %v67
    %86 = vst.msk [vmem:[#allocation2 + $0xa8] sm:$0xff] %vm78, %v69
    %87 = vrot.lane.b32.xlu0 %v29, 64
    %v88 = vpop.permute.xlu0 %87
    %89 = vrot.lane.b32.xlu0 %v30, 64
    %v90 = vpop.permute.xlu0 %89
    %91 = vrot.lane.b32.xlu0 %v31, 64
    %v92 = vpop.permute.xlu0 %91
    %93 = vrot.lane.b32.xlu0 %v32, 64
    %v94 = vpop.permute.xlu0 %93
    %95 = vrot.lane.b32.xlu0 %v33, 64
    %v96 = vpop.permute.xlu0 %95
    %97 = vrot.lane.b32.xlu0 %v34, 64
    %v98 = vpop.permute.xlu0 %97
    %99 = vrot.lane.b32.xlu0 %v35, 64
    %v100 = vpop.permute.xlu0 %99
    %101 = vrot.lane.b32.xlu0 %v36, 64
    %v102 = vpop.permute.xlu0 %101
    %vm111 = vcmask 785920
    %112 = vst.msk [vmem:[#allocation2] sm:$0xff] %vm111, %v88
    %113 = vst.msk [vmem:[#allocation2 + $0x18] sm:$0xff] %vm111, %v90
    %114 = vst.msk [vmem:[#allocation2 + $0x30] sm:$0xff] %vm111, %v92
    %115 = vst.msk [vmem:[#allocation2 + $0x48] sm:$0xff] %vm111, %v94
    %116 = vst.msk [vmem:[#allocation2 + $0x60] sm:$0xff] %vm111, %v96
    %117 = vst.msk [vmem:[#allocation2 + $0x78] sm:$0xff] %vm111, %v98
    %118 = vst.msk [vmem:[#allocation2 + $0x90] sm:$0xff] %vm111, %v100
    %119 = vst.msk [vmem:[#allocation2 + $0xa8] sm:$0xff] %vm111, %v102
    %120 = vrot.lane.b32.xlu0 %v29, 96
    %v121 = vpop.permute.xlu0 %120
    %122 = vrot.lane.b32.xlu0 %v30, 96
    %v123 = vpop.permute.xlu0 %122
    %124 = vrot.lane.b32.xlu0 %v31, 96
    %v125 = vpop.permute.xlu0 %124
    %126 = vrot.lane.b32.xlu0 %v32, 96
    %v127 = vpop.permute.xlu0 %126
    %128 = vrot.lane.b32.xlu0 %v33, 96
    %v129 = vpop.permute.xlu0 %128
    %130 = vrot.lane.b32.xlu0 %v34, 96
    %v131 = vpop.permute.xlu0 %130
    %132 = vrot.lane.b32.xlu0 %v35, 96
    %v133 = vpop.permute.xlu0 %132
    %134 = vrot.lane.b32.xlu0 %v36, 96
    %v135 = vpop.permute.xlu0 %134
    %vm144 = vcmask 1048320
    %145 = vst.msk [vmem:[#allocation2] sm:$0xff] %vm144, %v121
    %146 = vst.msk [vmem:[#allocation2 + $0x18] sm:$0xff] %vm144, %v123
    %147 = vst.msk [vmem:[#allocation2 + $0x30] sm:$0xff] %vm144, %v125
    %148 = vst.msk [vmem:[#allocation2 + $0x48] sm:$0xff] %vm144, %v127
    %149 = vst.msk [vmem:[#allocation2 + $0x60] sm:$0xff] %vm144, %v129
    %150 = vst.msk [vmem:[#allocation2 + $0x78] sm:$0xff] %vm144, %v131
    %151 = vst.msk [vmem:[#allocation2 + $0x90] sm:$0xff] %vm144, %v133
    %152 = vst.msk [vmem:[#allocation2 + $0xa8] sm:$0xff] %vm144, %v135
    %153 = vst.msk [vmem:[#allocation2 + $0x8] sm:$0xff] %vm37, %v29
    %154 = vst.msk [vmem:[#allocation2 + $0x20] sm:$0xff] %vm37, %v30
    %155 = vst.msk [vmem:[#allocation2 + $0x38] sm:$0xff] %vm37, %v31
    %156 = vst.msk [vmem:[#allocation2 + $0x50] sm:$0xff] %vm37, %v32
    %157 = vst.msk [vmem:[#allocation2 + $0x68] sm:$0xff] %vm37, %v33
    %158 = vst.msk [vmem:[#allocation2 + $0x80] sm:$0xff] %vm37, %v34
    %159 = vst.msk [vmem:[#allocation2 + $0x98] sm:$0xff] %vm37, %v35
    %160 = vst.msk [vmem:[#allocation2 + $0xb0] sm:$0xff] %vm37, %v36
    %161 = vst.msk [vmem:[#allocation2 + $0x8] sm:$0xff] %vm78, %v55
    %162 = vst.msk [vmem:[#allocation2 + $0x20] sm:$0xff] %vm78, %v57
    %163 = vst.msk [vmem:[#allocation2 + $0x38] sm:$0xff] %vm78, %v59
    %164 = vst.msk [vmem:[#allocation2 + $0x50] sm:$0xff] %vm78, %v61
    %165 = vst.msk [vmem:[#allocation2 + $0x68] sm:$0xff] %vm78, %v63
    %166 = vst.msk [vmem:[#allocation2 + $0x80] sm:$0xff] %vm78, %v65
    %167 = vst.msk [vmem:[#allocation2 + $0x98] sm:$0xff] %vm78, %v67
    %168 = vst.msk [vmem:[#allocation2 + $0xb0] sm:$0xff] %vm78, %v69
    %169 = vst.msk [vmem:[#allocation2 + $0x8] sm:$0xff] %vm111, %v88
    %170 = vst.msk [vmem:[#allocation2 + $0x20] sm:$0xff] %vm111, %v90
    %171 = vst.msk [vmem:[#allocation2 + $0x38] sm:$0xff] %vm111, %v92
    %172 = vst.msk [vmem:[#allocation2 + $0x50] sm:$0xff] %vm111, %v94
    %173 = vst.msk [vmem:[#allocation2 + $0x68] sm:$0xff] %vm111, %v96
    %174 = vst.msk [vmem:[#allocation2 + $0x80] sm:$0xff] %vm111, %v98
    %175 = vst.msk [vmem:[#allocation2 + $0x98] sm:$0xff] %vm111, %v100
    %176 = vst.msk [vmem:[#allocation2 + $0xb0] sm:$0xff] %vm111, %v102
    %177 = vst.msk [vmem:[#allocation2 + $0x8] sm:$0xff] %vm144, %v121
    %178 = vst.msk [vmem:[#allocation2 + $0x20] sm:$0xff] %vm144, %v123
    %179 = vst.msk [vmem:[#allocation2 + $0x38] sm:$0xff] %vm144, %v125
    %180 = vst.msk [vmem:[#allocation2 + $0x50] sm:$0xff] %vm144, %v127
    %181 = vst.msk [vmem:[#allocation2 + $0x68] sm:$0xff] %vm144, %v129
    %182 = vst.msk [vmem:[#allocation2 + $0x80] sm:$0xff] %vm144, %v131
    %183 = vst.msk [vmem:[#allocation2 + $0x98] sm:$0xff] %vm144, %v133
    %184 = vst.msk [vmem:[#allocation2 + $0xb0] sm:$0xff] %vm144, %v135
    %185 = vst.msk [vmem:[#allocation2 + $0x10] sm:$0xff] %vm37, %v29
    %186 = vst.msk [vmem:[#allocation2 + $0x28] sm:$0xff] %vm37, %v30
    %187 = vst.msk [vmem:[#allocation2 + $0x40] sm:$0xff] %vm37, %v31
    %188 = vst.msk [vmem:[#allocation2 + $0x58] sm:$0xff] %vm37, %v32
    %189 = vst.msk [vmem:[#allocation2 + $0x70] sm:$0xff] %vm37, %v33
    %190 = vst.msk [vmem:[#allocation2 + $0x88] sm:$0xff] %vm37, %v34
    %191 = vst.msk [vmem:[#allocation2 + $0xa0] sm:$0xff] %vm37, %v35
    %192 = vst.msk [vmem:[#allocation2 + $0xb8] sm:$0xff] %vm37, %v36
    %193 = vst.msk [vmem:[#allocation2 + $0x10] sm:$0xff] %vm78, %v55
    %194 = vst.msk [vmem:[#allocation2 + $0x28] sm:$0xff] %vm78, %v57
    %195 = vst.msk [vmem:[#allocation2 + $0x40] sm:$0xff] %vm78, %v59
    %196 = vst.msk [vmem:[#allocation2 + $0x58] sm:$0xff] %vm78, %v61
    %197 = vst.msk [vmem:[#allocation2 + $0x70] sm:$0xff] %vm78, %v63
    %198 = vst.msk [vmem:[#allocation2 + $0x88] sm:$0xff] %vm78, %v65
    %199 = vst.msk [vmem:[#allocation2 + $0xa0] sm:$0xff] %vm78, %v67
    %200 = vst.msk [vmem:[#allocation2 + $0xb8] sm:$0xff] %vm78, %v69
    %201 = vst.msk [vmem:[#allocation2 + $0x10] sm:$0xff] %vm111, %v88
    %202 = vst.msk [vmem:[#allocation2 + $0x28] sm:$0xff] %vm111, %v90
    %203 = vst.msk [vmem:[#allocation2 + $0x40] sm:$0xff] %vm111, %v92
    %204 = vst.msk [vmem:[#allocation2 + $0x58] sm:$0xff] %vm111, %v94
    %205 = vst.msk [vmem:[#allocation2 + $0x70] sm:$0xff] %vm111, %v96
    %206 = vst.msk [vmem:[#allocation2 + $0x88] sm:$0xff] %vm111, %v98
    %207 = vst.msk [vmem:[#allocation2 + $0xa0] sm:$0xff] %vm111, %v100
    %208 = vst.msk [vmem:[#allocation2 + $0xb8] sm:$0xff] %vm111, %v102
    %v209 = vld [vmem:[#allocation2] sm:$0xff]
    %v210 = vld [vmem:[#allocation2 + $0x8] sm:$0xff]
    %v211 = vld [vmem:[#allocation2 + $0x10] sm:$0xff]
    %v212 = vld [vmem:[#allocation2 + $0x18] sm:$0xff]
    %v213 = vld [vmem:[#allocation2 + $0x20] sm:$0xff]
    %v214 = vld [vmem:[#allocation2 + $0x28] sm:$0xff]
    %v215 = vld [vmem:[#allocation2 + $0x30] sm:$0xff]
    %v216 = vld [vmem:[#allocation2 + $0x38] sm:$0xff]
    %v217 = vld [vmem:[#allocation2 + $0x40] sm:$0xff]
    %v218 = vld [vmem:[#allocation2 + $0x48] sm:$0xff]
    %v219 = vld [vmem:[#allocation2 + $0x50] sm:$0xff]
    %v220 = vld [vmem:[#allocation2 + $0x58] sm:$0xff]
    %v221 = vld [vmem:[#allocation2 + $0x60] sm:$0xff]
    %v222 = vld [vmem:[#allocation2 + $0x68] sm:$0xff]
    %v223 = vld [vmem:[#allocation2 + $0x70] sm:$0xff]
    %v224 = vld [vmem:[#allocation2 + $0x78] sm:$0xff]
    %v225 = vld [vmem:[#allocation2 + $0x80] sm:$0xff]
    %v226 = vld [vmem:[#allocation2 + $0x88] sm:$0xff]
    %v227 = vld [vmem:[#allocation2 + $0x90] sm:$0xff]
    %v228 = vld [vmem:[#allocation2 + $0x98] sm:$0xff]
    %v229 = vld [vmem:[#allocation2 + $0xa0] sm:$0xff]
    %v230 = vld [vmem:[#allocation2 + $0xa8] sm:$0xff]
    %v231 = vld [vmem:[#allocation2 + $0xb0] sm:$0xff]
    %v232 = vld [vmem:[#allocation2 + $0xb8] sm:$0xff]
    %v233 = vld [vmem:[%s1] ss:$8 sm:$0x7]
    %s234 = scalar_lea.vmem %s1, 1
    %v235 = vld [vmem:[%s234] ss:$8 sm:$0x7]
    %v237 = vlaneseq
    %v238 = vshrl.u32 %v237, 7
    %v239 = vsub.s32 0, %v238
    %v240 = vrot.slane %v233, %v239
    %v241 = vlaneseq
    %v242 = vshrl.u32 %v241, 7
    %v243 = vsub.s32 1, %v242
    %v244 = vrot.slane %v233, %v243
    %v245 = vlaneseq
    %v246 = vshrl.u32 %v245, 7
    %v247 = vsub.s32 2, %v246
    %v248 = vrot.slane %v233, %v247
    %vm252 = vcmp.ge.f32.partialorder %v209, %v240
    %vm253 = vcmp.ge.f32.partialorder %v210, %v244
    %vm254 = vcmp.ge.f32.partialorder %v211, %v248
    %vm255 = vcmp.ge.f32.partialorder %v212, %v240
    %vm256 = vcmp.ge.f32.partialorder %v213, %v244
    %vm257 = vcmp.ge.f32.partialorder %v214, %v248
    %vm258 = vcmp.ge.f32.partialorder %v215, %v240
    %vm259 = vcmp.ge.f32.partialorder %v216, %v244
    %vm260 = vcmp.ge.f32.partialorder %v217, %v248
    %vm261 = vcmp.ge.f32.partialorder %v218, %v240
    %vm262 = vcmp.ge.f32.partialorder %v219, %v244
    %vm263 = vcmp.ge.f32.partialorder %v220, %v248
    %vm264 = vcmp.ge.f32.partialorder %v221, %v240
    %vm265 = vcmp.ge.f32.partialorder %v222, %v244
    %vm266 = vcmp.ge.f32.partialorder %v223, %v248
    %vm267 = vcmp.ge.f32.partialorder %v224, %v240
    %vm268 = vcmp.ge.f32.partialorder %v225, %v244
    %vm269 = vcmp.ge.f32.partialorder %v226, %v248
    %vm270 = vcmp.ge.f32.partialorder %v227, %v240
    %vm271 = vcmp.ge.f32.partialorder %v228, %v244
    %vm272 = vcmp.ge.f32.partialorder %v229, %v248
    %vm273 = vcmp.ge.f32.partialorder %v230, %v240
    %vm274 = vcmp.ge.f32.partialorder %v231, %v244
    %vm275 = vcmp.ge.f32.partialorder %v232, %v248
    %v277 = vlaneseq
    %v278 = vshrl.u32 %v277, 7
    %v279 = vsub.s32 0, %v278
    %v280 = vrot.slane %v235, %v279
    %v281 = vlaneseq
    %v282 = vshrl.u32 %v281, 7
    %v283 = vsub.s32 1, %v282
    %v284 = vrot.slane %v235, %v283
    %v285 = vlaneseq
    %v286 = vshrl.u32 %v285, 7
    %v287 = vsub.s32 2, %v286
    %v288 = vrot.slane %v235, %v287
    %vm292 = vcmp.lt.f32.partialorder %v209, %v280
    %vm293 = vcmp.lt.f32.partialorder %v210, %v284
    %vm294 = vcmp.lt.f32.partialorder %v211, %v288
    %vm295 = vcmp.lt.f32.partialorder %v212, %v280
    %vm296 = vcmp.lt.f32.partialorder %v213, %v284
    %vm297 = vcmp.lt.f32.partialorder %v214, %v288
    %vm298 = vcmp.lt.f32.partialorder %v215, %v280
    %vm299 = vcmp.lt.f32.partialorder %v216, %v284
    %vm300 = vcmp.lt.f32.partialorder %v217, %v288
    %vm301 = vcmp.lt.f32.partialorder %v218, %v280
    %vm302 = vcmp.lt.f32.partialorder %v219, %v284
    %vm303 = vcmp.lt.f32.partialorder %v220, %v288
    %vm304 = vcmp.lt.f32.partialorder %v221, %v280
    %vm305 = vcmp.lt.f32.partialorder %v222, %v284
    %vm306 = vcmp.lt.f32.partialorder %v223, %v288
    %vm307 = vcmp.lt.f32.partialorder %v224, %v280
    %vm308 = vcmp.lt.f32.partialorder %v225, %v284
    %vm309 = vcmp.lt.f32.partialorder %v226, %v288
    %vm310 = vcmp.lt.f32.partialorder %v227, %v280
    %vm311 = vcmp.lt.f32.partialorder %v228, %v284
    %vm312 = vcmp.lt.f32.partialorder %v229, %v288
    %vm313 = vcmp.lt.f32.partialorder %v230, %v280
    %vm314 = vcmp.lt.f32.partialorder %v231, %v284
    %vm315 = vcmp.lt.f32.partialorder %v232, %v288
    %vm316 = vmand %vm252, %vm292
    %vm317 = vmand %vm253, %vm293
    %vm318 = vmand %vm254, %vm294
    %vm319 = vmand %vm255, %vm295
    %vm320 = vmand %vm256, %vm296
    %vm321 = vmand %vm257, %vm297
    %vm322 = vmand %vm258, %vm298
    %vm323 = vmand %vm259, %vm299
    %vm324 = vmand %vm260, %vm300
    %vm325 = vmand %vm261, %vm301
    %vm326 = vmand %vm262, %vm302
    %vm327 = vmand %vm263, %vm303
    %vm328 = vmand %vm264, %vm304
    %vm329 = vmand %vm265, %vm305
    %vm330 = vmand %vm266, %vm306
    %vm331 = vmand %vm267, %vm307
    %vm332 = vmand %vm268, %vm308
    %vm333 = vmand %vm269, %vm309
    %vm334 = vmand %vm270, %vm310
    %vm335 = vmand %vm271, %vm311
    %vm336 = vmand %vm272, %vm312
    %vm337 = vmand %vm273, %vm313
    %vm338 = vmand %vm274, %vm314
    %vm339 = vmand %vm275, %vm315
    %v340 = vsel %vm316, 1.0, 0.0
    %v341 = vsel %vm317, 1.0, 0.0
    %v342 = vsel %vm318, 1.0, 0.0
    %v343 = vsel %vm319, 1.0, 0.0
    %v344 = vsel %vm320, 1.0, 0.0
    %v345 = vsel %vm321, 1.0, 0.0
    %v346 = vsel %vm322, 1.0, 0.0
    %v347 = vsel %vm323, 1.0, 0.0
    %v348 = vsel %vm324, 1.0, 0.0
    %v349 = vsel %vm325, 1.0, 0.0
    %v350 = vsel %vm326, 1.0, 0.0
    %v351 = vsel %vm327, 1.0, 0.0
    %v352 = vsel %vm328, 1.0, 0.0
    %v353 = vsel %vm329, 1.0, 0.0
    %v354 = vsel %vm330, 1.0, 0.0
    %v355 = vsel %vm331, 1.0, 0.0
    %v356 = vsel %vm332, 1.0, 0.0
    %v357 = vsel %vm333, 1.0, 0.0
    %v358 = vsel %vm334, 1.0, 0.0
    %v359 = vsel %vm335, 1.0, 0.0
    %v360 = vsel %vm336, 1.0, 0.0
    %v361 = vsel %vm337, 1.0, 0.0
    %v362 = vsel %vm338, 1.0, 0.0
    %v363 = vsel %vm339, 1.0, 0.0
    %364 = vst [vmem:[#allocation3] sm:$0xff] %v340
    %365 = vst [vmem:[#allocation3 + $0x8] sm:$0xff] %v341
    %vm366 = vcmask 785408
    %367 = vst.msk [vmem:[#allocation3 + $0x10] sm:$0xff] %vm366, %v342
    %368 = vst [vmem:[#allocation3 + $0x18] sm:$0xff] %v343
    %369 = vst [vmem:[#allocation3 + $0x20] sm:$0xff] %v344
    %370 = vst.msk [vmem:[#allocation3 + $0x28] sm:$0xff] %vm366, %v345
    %371 = vst [vmem:[#allocation3 + $0x30] sm:$0xff] %v346
    %372 = vst [vmem:[#allocation3 + $0x38] sm:$0xff] %v347
    %373 = vst.msk [vmem:[#allocation3 + $0x40] sm:$0xff] %vm366, %v348
    %374 = vst [vmem:[#allocation3 + $0x48] sm:$0xff] %v349
    %375 = vst [vmem:[#allocation3 + $0x50] sm:$0xff] %v350
    %376 = vst.msk [vmem:[#allocation3 + $0x58] sm:$0xff] %vm366, %v351
    %377 = vst [vmem:[#allocation3 + $0x60] sm:$0xff] %v352
    %378 = vst [vmem:[#allocation3 + $0x68] sm:$0xff] %v353
    %379 = vst.msk [vmem:[#allocation3 + $0x70] sm:$0xff] %vm366, %v354
    %380 = vst [vmem:[#allocation3 + $0x78] sm:$0xff] %v355
    %381 = vst [vmem:[#allocation3 + $0x80] sm:$0xff] %v356
    %382 = vst.msk [vmem:[#allocation3 + $0x88] sm:$0xff] %vm366, %v357
    %383 = vst [vmem:[#allocation3 + $0x90] sm:$0xff] %v358
    %384 = vst [vmem:[#allocation3 + $0x98] sm:$0xff] %v359
    %385 = vst.msk [vmem:[#allocation3 + $0xa0] sm:$0xff] %vm366, %v360
    %386 = vst [vmem:[#allocation3 + $0xa8] sm:$0xff] %v361
    %387 = vst [vmem:[#allocation3 + $0xb0] sm:$0xff] %v362
    %388 = vst.msk [vmem:[#allocation3 + $0xb8] sm:$0xff] %vm366, %v363
    %v389 = vld [vmem:[#allocation2] sm:$0xff]
    %v390 = vld [vmem:[#allocation2 + $0x8] sm:$0xff]
    %v391 = vld [vmem:[#allocation2 + $0x10] sm:$0xff]
    %v392 = vld [vmem:[#allocation2 + $0x18] sm:$0xff]
    %v393 = vld [vmem:[#allocation2 + $0x20] sm:$0xff]
    %v394 = vld [vmem:[#allocation2 + $0x28] sm:$0xff]
    %v395 = vld [vmem:[#allocation2 + $0x30] sm:$0xff]
    %v396 = vld [vmem:[#allocation2 + $0x38] sm:$0xff]
    %v397 = vld [vmem:[#allocation2 + $0x40] sm:$0xff]
    %v398 = vld [vmem:[#allocation2 + $0x48] sm:$0xff]
    %v399 = vld [vmem:[#allocation2 + $0x50] sm:$0xff]
    %v400 = vld [vmem:[#allocation2 + $0x58] sm:$0xff]
    %v401 = vld [vmem:[#allocation2 + $0x60] sm:$0xff]
    %v402 = vld [vmem:[#allocation2 + $0x68] sm:$0xff]
    %v403 = vld [vmem:[#allocation2 + $0x70] sm:$0xff]
    %v404 = vld [vmem:[#allocation2 + $0x78] sm:$0xff]
    %v405 = vld [vmem:[#allocation2 + $0x80] sm:$0xff]
    %v406 = vld [vmem:[#allocation2 + $0x88] sm:$0xff]
    %v407 = vld [vmem:[#allocation2 + $0x90] sm:$0xff]
    %v408 = vld [vmem:[#allocation2 + $0x98] sm:$0xff]
    %v409 = vld [vmem:[#allocation2 + $0xa0] sm:$0xff]
    %v410 = vld [vmem:[#allocation2 + $0xa8] sm:$0xff]
    %v411 = vld [vmem:[#allocation2 + $0xb0] sm:$0xff]
    %v412 = vld [vmem:[#allocation2 + $0xb8] sm:$0xff]
    %s413 = scalar_lea.vmem %s1, 2
    %v414 = vld [vmem:[%s413] ss:$8 sm:$0x7]
    %v416 = vlaneseq
    %v417 = vshrl.u32 %v416, 7
    %v418 = vsub.s32 0, %v417
    %v419 = vrot.slane %v414, %v418
    %v420 = vlaneseq
    %v421 = vshrl.u32 %v420, 7
    %v422 = vsub.s32 1, %v421
    %v423 = vrot.slane %v414, %v422
    %v424 = vlaneseq
    %v425 = vshrl.u32 %v424, 7
    %v426 = vsub.s32 2, %v425
    %v427 = vrot.slane %v414, %v426
    %v431 = vmul.f32 %v389, %v419
    %v432 = vmul.f32 %v390, %v423
    %v433 = vmul.f32 %v391, %v427
    %v434 = vmul.f32 %v392, %v419
    %v435 = vmul.f32 %v393, %v423
    %v436 = vmul.f32 %v394, %v427
    %v437 = vmul.f32 %v395, %v419
    %v438 = vmul.f32 %v396, %v423
    %v439 = vmul.f32 %v397, %v427
    %v440 = vmul.f32 %v398, %v419
    %v441 = vmul.f32 %v399, %v423
    %v442 = vmul.f32 %v400, %v427
    %v443 = vmul.f32 %v401, %v419
    %v444 = vmul.f32 %v402, %v423
    %v445 = vmul.f32 %v403, %v427
    %v446 = vmul.f32 %v404, %v419
    %v447 = vmul.f32 %v405, %v423
    %v448 = vmul.f32 %v406, %v427
    %v449 = vmul.f32 %v407, %v419
    %v450 = vmul.f32 %v408, %v423
    %v451 = vmul.f32 %v409, %v427
    %v452 = vmul.f32 %v410, %v419
    %v453 = vmul.f32 %v411, %v423
    %v454 = vmul.f32 %v412, %v427
    %s455 = scalar_lea.vmem %s1, 3
    %v456 = vld [vmem:[%s455] ss:$8 sm:$0x7]
    %v458 = vlaneseq
    %v459 = vshrl.u32 %v458, 7
    %v460 = vsub.s32 0, %v459
    %v461 = vrot.slane %v456, %v460
    %v462 = vlaneseq
    %v463 = vshrl.u32 %v462, 7
    %v464 = vsub.s32 1, %v463
    %v465 = vrot.slane %v456, %v464
    %v466 = vlaneseq
    %v467 = vshrl.u32 %v466, 7
    %v468 = vsub.s32 2, %v467
    %v469 = vrot.slane %v456, %v468
    %v473 = vadd.f32 %v431, %v461
    %v474 = vadd.f32 %v432, %v465
    %v475 = vadd.f32 %v433, %v469
    %v476 = vadd.f32 %v434, %v461
    %v477 = vadd.f32 %v435, %v465
    %v478 = vadd.f32 %v436, %v469
    %v479 = vadd.f32 %v437, %v461
    %v480 = vadd.f32 %v438, %v465
    %v481 = vadd.f32 %v439, %v469
    %v482 = vadd.f32 %v440, %v461
    %v483 = vadd.f32 %v441, %v465
    %v484 = vadd.f32 %v442, %v469
    %v485 = vadd.f32 %v443, %v461
    %v486 = vadd.f32 %v444, %v465
    %v487 = vadd.f32 %v445, %v469
    %v488 = vadd.f32 %v446, %v461
    %v489 = vadd.f32 %v447, %v465
    %v490 = vadd.f32 %v448, %v469
    %v491 = vadd.f32 %v449, %v461
    %v492 = vadd.f32 %v450, %v465
    %v493 = vadd.f32 %v451, %v469
    %v494 = vadd.f32 %v452, %v461
    %v495 = vadd.f32 %v453, %v465
    %v496 = vadd.f32 %v454, %v469
    %s497 = scalar_lea.vmem %s1, 4
    %v498 = vld [vmem:[%s497] ss:$8 sm:$0x7]
    %v500 = vlaneseq
    %v501 = vshrl.u32 %v500, 7
    %v502 = vsub.s32 0, %v501
    %v503 = vrot.slane %v498, %v502
    %v504 = vlaneseq
    %v505 = vshrl.u32 %v504, 7
    %v506 = vsub.s32 1, %v505
    %v507 = vrot.slane %v498, %v506
    %v508 = vlaneseq
    %v509 = vshrl.u32 %v508, 7
    %v510 = vsub.s32 2, %v509
    %v511 = vrot.slane %v498, %v510
    %v515 = vmul.f32 %v389, %v503
    %v516 = vmul.f32 %v390, %v507
    %v517 = vmul.f32 %v391, %v511
    %v518 = vmul.f32 %v392, %v503
    %v519 = vmul.f32 %v393, %v507
    %v520 = vmul.f32 %v394, %v511
    %v521 = vmul.f32 %v395, %v503
    %v522 = vmul.f32 %v396, %v507
    %v523 = vmul.f32 %v397, %v511
    %v524 = vmul.f32 %v398, %v503
    %v525 = vmul.f32 %v399, %v507
    %v526 = vmul.f32 %v400, %v511
    %v527 = vmul.f32 %v401, %v503
    %v528 = vmul.f32 %v402, %v507
    %v529 = vmul.f32 %v403, %v511
    %v530 = vmul.f32 %v404, %v503
    %v531 = vmul.f32 %v405, %v507
    %v532 = vmul.f32 %v406, %v511
    %v533 = vmul.f32 %v407, %v503
    %v534 = vmul.f32 %v408, %v507
    %v535 = vmul.f32 %v409, %v511
    %v536 = vmul.f32 %v410, %v503
    %v537 = vmul.f32 %v411, %v507
    %v538 = vmul.f32 %v412, %v511
    %s539 = scalar_lea.vmem %s1, 5
    %v540 = vld [vmem:[%s539] ss:$8 sm:$0x7]
    %v542 = vlaneseq
    %v543 = vshrl.u32 %v542, 7
    %v544 = vsub.s32 0, %v543
    %v545 = vrot.slane %v540, %v544
    %v546 = vlaneseq
    %v547 = vshrl.u32 %v546, 7
    %v548 = vsub.s32 1, %v547
    %v549 = vrot.slane %v540, %v548
    %v550 = vlaneseq
    %v551 = vshrl.u32 %v550, 7
    %v552 = vsub.s32 2, %v551
    %v553 = vrot.slane %v540, %v552
    %v557 = vadd.f32 %v515, %v545
    %v558 = vadd.f32 %v516, %v549
    %v559 = vadd.f32 %v517, %v553
    %v560 = vadd.f32 %v518, %v545
    %v561 = vadd.f32 %v519, %v549
    %v562 = vadd.f32 %v520, %v553
    %v563 = vadd.f32 %v521, %v545
    %v564 = vadd.f32 %v522, %v549
    %v565 = vadd.f32 %v523, %v553
    %v566 = vadd.f32 %v524, %v545
    %v567 = vadd.f32 %v525, %v549
    %v568 = vadd.f32 %v526, %v553
    %v569 = vadd.f32 %v527, %v545
    %v570 = vadd.f32 %v528, %v549
    %v571 = vadd.f32 %v529, %v553
    %v572 = vadd.f32 %v530, %v545
    %v573 = vadd.f32 %v531, %v549
    %v574 = vadd.f32 %v532, %v553
    %v575 = vadd.f32 %v533, %v545
    %v576 = vadd.f32 %v534, %v549
    %v577 = vadd.f32 %v535, %v553
    %v578 = vadd.f32 %v536, %v545
    %v579 = vadd.f32 %v537, %v549
    %v580 = vadd.f32 %v538, %v553
    %v581 = vld [vmem:[#allocation3] sm:$0xff]
    %v582 = vld [vmem:[#allocation3 + $0x8] sm:$0xff]
    %v583 = vld [vmem:[#allocation3 + $0x10] sm:$0xff]
    %v584 = vld [vmem:[#allocation3 + $0x18] sm:$0xff]
    %v585 = vld [vmem:[#allocation3 + $0x20] sm:$0xff]
    %v586 = vld [vmem:[#allocation3 + $0x28] sm:$0xff]
    %v587 = vld [vmem:[#allocation3 + $0x30] sm:$0xff]
    %v588 = vld [vmem:[#allocation3 + $0x38] sm:$0xff]
    %v589 = vld [vmem:[#allocation3 + $0x40] sm:$0xff]
    %v590 = vld [vmem:[#allocation3 + $0x48] sm:$0xff]
    %v591 = vld [vmem:[#allocation3 + $0x50] sm:$0xff]
    %v592 = vld [vmem:[#allocation3 + $0x58] sm:$0xff]
    %v593 = vld [vmem:[#allocation3 + $0x60] sm:$0xff]
    %v594 = vld [vmem:[#allocation3 + $0x68] sm:$0xff]
    %v595 = vld [vmem:[#allocation3 + $0x70] sm:$0xff]
    %v596 = vld [vmem:[#allocation3 + $0x78] sm:$0xff]
    %v597 = vld [vmem:[#allocation3 + $0x80] sm:$0xff]
    %v598 = vld [vmem:[#allocation3 + $0x88] sm:$0xff]
    %v599 = vld [vmem:[#allocation3 + $0x90] sm:$0xff]
    %v600 = vld [vmem:[#allocation3 + $0x98] sm:$0xff]
    %v601 = vld [vmem:[#allocation3 + $0xa0] sm:$0xff]
    %v602 = vld [vmem:[#allocation3 + $0xa8] sm:$0xff]
    %v603 = vld [vmem:[#allocation3 + $0xb0] sm:$0xff]
    %v604 = vld [vmem:[#allocation3 + $0xb8] sm:$0xff]
    %v605 = vmul.f32 %v473, %v581
    %v606 = vmul.f32 %v474, %v582
    %v607 = vmul.f32 %v475, %v583
    %v608 = vmul.f32 %v476, %v584
    %v609 = vmul.f32 %v477, %v585
    %v610 = vmul.f32 %v478, %v586
    %v611 = vmul.f32 %v479, %v587
    %v612 = vmul.f32 %v480, %v588
    %v613 = vmul.f32 %v481, %v589
    %v614 = vmul.f32 %v482, %v590
    %v615 = vmul.f32 %v483, %v591
    %v616 = vmul.f32 %v484, %v592
    %v617 = vmul.f32 %v485, %v593
    %v618 = vmul.f32 %v486, %v594
    %v619 = vmul.f32 %v487, %v595
    %v620 = vmul.f32 %v488, %v596
    %v621 = vmul.f32 %v489, %v597
    %v622 = vmul.f32 %v490, %v598
    %v623 = vmul.f32 %v491, %v599
    %v624 = vmul.f32 %v492, %v600
    %v625 = vmul.f32 %v493, %v601
    %v626 = vmul.f32 %v494, %v602
    %v627 = vmul.f32 %v495, %v603
    %v628 = vmul.f32 %v496, %v604
    %653 = vrot.lane.b32.xlu0 %v581, 96
    %v654 = vpop.permute.xlu0 %653
    %655 = vrot.lane.b32.xlu0 %v582, 96
    %v656 = vpop.permute.xlu0 %655
    %657 = vrot.lane.b32.xlu0 %v583, 96
    %v658 = vpop.permute.xlu0 %657
    %659 = vrot.lane.b32.xlu0 %v584, 96
    %v660 = vpop.permute.xlu0 %659
    %661 = vrot.lane.b32.xlu0 %v585, 96
    %v662 = vpop.permute.xlu0 %661
    %663 = vrot.lane.b32.xlu0 %v586, 96
    %v664 = vpop.permute.xlu0 %663
    %665 = vrot.lane.b32.xlu0 %v587, 96
    %v666 = vpop.permute.xlu0 %665
    %667 = vrot.lane.b32.xlu0 %v588, 96
    %v668 = vpop.permute.xlu0 %667
    %669 = vrot.lane.b32.xlu0 %v589, 96
    %v670 = vpop.permute.xlu0 %669
    %671 = vrot.lane.b32.xlu0 %v590, 96
    %v672 = vpop.permute.xlu0 %671
    %673 = vrot.lane.b32.xlu0 %v591, 96
    %v674 = vpop.permute.xlu0 %673
    %675 = vrot.lane.b32.xlu0 %v592, 96
    %v676 = vpop.permute.xlu0 %675
    %677 = vrot.lane.b32.xlu0 %v593, 96
    %v678 = vpop.permute.xlu0 %677
    %679 = vrot.lane.b32.xlu0 %v594, 96
    %v680 = vpop.permute.xlu0 %679
    %681 = vrot.lane.b32.xlu0 %v595, 96
    %v682 = vpop.permute.xlu0 %681
    %683 = vrot.lane.b32.xlu0 %v596, 96
    %v684 = vpop.permute.xlu0 %683
    %685 = vrot.lane.b32.xlu0 %v597, 96
    %v686 = vpop.permute.xlu0 %685
    %687 = vrot.lane.b32.xlu0 %v598, 96
    %v688 = vpop.permute.xlu0 %687
    %689 = vrot.lane.b32.xlu0 %v599, 96
    %v690 = vpop.permute.xlu0 %689
    %691 = vrot.lane.b32.xlu0 %v600, 96
    %v692 = vpop.permute.xlu0 %691
    %693 = vrot.lane.b32.xlu0 %v601, 96
    %v694 = vpop.permute.xlu0 %693
    %695 = vrot.lane.b32.xlu0 %v602, 96
    %v696 = vpop.permute.xlu0 %695
    %697 = vrot.lane.b32.xlu0 %v603, 96
    %v698 = vpop.permute.xlu0 %697
    %699 = vrot.lane.b32.xlu0 %v604, 96
    %v700 = vpop.permute.xlu0 %699
    %v701 = vsel %vm366, %v654, %v656
    %v702 = vsel %vm366, %v656, %v658
    %v703 = vsel %vm366, %v660, %v662
    %v704 = vsel %vm366, %v662, %v664
    %v705 = vsel %vm366, %v666, %v668
    %v706 = vsel %vm366, %v668, %v670
    %v707 = vsel %vm366, %v672, %v674
    %v708 = vsel %vm366, %v674, %v676
    %v709 = vsel %vm366, %v678, %v680
    %v710 = vsel %vm366, %v680, %v682
    %v711 = vsel %vm366, %v684, %v686
    %v712 = vsel %vm366, %v686, %v688
    %v713 = vsel %vm366, %v690, %v692
    %v714 = vsel %vm366, %v692, %v694
    %v715 = vsel %vm366, %v696, %v698
    %v716 = vsel %vm366, %v698, %v700
    %v741 = vmul.f32 %v557, %v701
    %v742 = vmul.f32 %v558, %v702
    %v743 = vmul.f32 %v559, %v658
    %v744 = vmul.f32 %v560, %v703
    %v745 = vmul.f32 %v561, %v704
    %v746 = vmul.f32 %v562, %v664
    %v747 = vmul.f32 %v563, %v705
    %v748 = vmul.f32 %v564, %v706
    %v749 = vmul.f32 %v565, %v670
    %v750 = vmul.f32 %v566, %v707
    %v751 = vmul.f32 %v567, %v708
    %v752 = vmul.f32 %v568, %v676
    %v753 = vmul.f32 %v569, %v709
    %v754 = vmul.f32 %v570, %v710
    %v755 = vmul.f32 %v571, %v682
    %v756 = vmul.f32 %v572, %v711
    %v757 = vmul.f32 %v573, %v712
    %v758 = vmul.f32 %v574, %v688
    %v759 = vmul.f32 %v575, %v713
    %v760 = vmul.f32 %v576, %v714
    %v761 = vmul.f32 %v577, %v694
    %v762 = vmul.f32 %v578, %v715
    %v763 = vmul.f32 %v579, %v716
    %v764 = vmul.f32 %v580, %v700
    %v765 = vadd.f32 %v605, %v741
    %v766 = vadd.f32 %v606, %v742
    %v767 = vadd.f32 %v607, %v743
    %v768 = vadd.f32 %v608, %v744
    %v769 = vadd.f32 %v609, %v745
    %v770 = vadd.f32 %v610, %v746
    %v771 = vadd.f32 %v611, %v747
    %v772 = vadd.f32 %v612, %v748
    %v773 = vadd.f32 %v613, %v749
    %v774 = vadd.f32 %v614, %v750
    %v775 = vadd.f32 %v615, %v751
    %v776 = vadd.f32 %v616, %v752
    %v777 = vadd.f32 %v617, %v753
    %v778 = vadd.f32 %v618, %v754
    %v779 = vadd.f32 %v619, %v755
    %v780 = vadd.f32 %v620, %v756
    %v781 = vadd.f32 %v621, %v757
    %v782 = vadd.f32 %v622, %v758
    %v783 = vadd.f32 %v623, %v759
    %v784 = vadd.f32 %v624, %v760
    %v785 = vadd.f32 %v625, %v761
    %v786 = vadd.f32 %v626, %v762
    %v787 = vadd.f32 %v627, %v763
    %v788 = vadd.f32 %v628, %v764
    %789 = vst [vmem:[#allocation3] sm:$0xff] %v765
    %790 = vst [vmem:[#allocation3 + $0x8] sm:$0xff] %v766
    %vm791 = vcmask 523264
    %792 = vst.msk [vmem:[#allocation3 + $0x10] sm:$0xff] %vm791, %v767
    %793 = vst [vmem:[#allocation3 + $0x18] sm:$0xff] %v768
    %794 = vst [vmem:[#allocation3 + $0x20] sm:$0xff] %v769
    %795 = vst.msk [vmem:[#allocation3 + $0x28] sm:$0xff] %vm791, %v770
    %796 = vst [vmem:[#allocation3 + $0x30] sm:$0xff] %v771
    %797 = vst [vmem:[#allocation3 + $0x38] sm:$0xff] %v772
    %798 = vst.msk [vmem:[#allocation3 + $0x40] sm:$0xff] %vm791, %v773
    %799 = vst [vmem:[#allocation3 + $0x48] sm:$0xff] %v774
    %800 = vst [vmem:[#allocation3 + $0x50] sm:$0xff] %v775
    %801 = vst.msk [vmem:[#allocation3 + $0x58] sm:$0xff] %vm791, %v776
    %802 = vst [vmem:[#allocation3 + $0x60] sm:$0xff] %v777
    %803 = vst [vmem:[#allocation3 + $0x68] sm:$0xff] %v778
    %804 = vst.msk [vmem:[#allocation3 + $0x70] sm:$0xff] %vm791, %v779
    %805 = vst [vmem:[#allocation3 + $0x78] sm:$0xff] %v780
    %806 = vst [vmem:[#allocation3 + $0x80] sm:$0xff] %v781
    %807 = vst.msk [vmem:[#allocation3 + $0x88] sm:$0xff] %vm791, %v782
    %808 = vst [vmem:[#allocation3 + $0x90] sm:$0xff] %v783
    %809 = vst [vmem:[#allocation3 + $0x98] sm:$0xff] %v784
    %810 = vst.msk [vmem:[#allocation3 + $0xa0] sm:$0xff] %vm791, %v785
    %811 = vst [vmem:[#allocation3 + $0xa8] sm:$0xff] %v786
    %812 = vst [vmem:[#allocation3 + $0xb0] sm:$0xff] %v787
    %813 = vst.msk [vmem:[#allocation3 + $0xb8] sm:$0xff] %vm791, %v788
    %v814 = vld [vmem:[#allocation2] sm:$0xff]
    %v815 = vld [vmem:[#allocation2 + $0x8] sm:$0xff]
    %v816 = vld [vmem:[#allocation2 + $0x10] sm:$0xff]
    %v817 = vld [vmem:[#allocation2 + $0x18] sm:$0xff]
    %v818 = vld [vmem:[#allocation2 + $0x20] sm:$0xff]
    %v819 = vld [vmem:[#allocation2 + $0x28] sm:$0xff]
    %v820 = vld [vmem:[#allocation2 + $0x30] sm:$0xff]
    %v821 = vld [vmem:[#allocation2 + $0x38] sm:$0xff]
    %v822 = vld [vmem:[#allocation2 + $0x40] sm:$0xff]
    %v823 = vld [vmem:[#allocation2 + $0x48] sm:$0xff]
    %v824 = vld [vmem:[#allocation2 + $0x50] sm:$0xff]
    %v825 = vld [vmem:[#allocation2 + $0x58] sm:$0xff]
    %v826 = vld [vmem:[#allocation2 + $0x60] sm:$0xff]
    %v827 = vld [vmem:[#allocation2 + $0x68] sm:$0xff]
    %v828 = vld [vmem:[#allocation2 + $0x70] sm:$0xff]
    %v829 = vld [vmem:[#allocation2 + $0x78] sm:$0xff]
    %v830 = vld [vmem:[#allocation2 + $0x80] sm:$0xff]
    %v831 = vld [vmem:[#allocation2 + $0x88] sm:$0xff]
    %v832 = vld [vmem:[#allocation2 + $0x90] sm:$0xff]
    %v833 = vld [vmem:[#allocation2 + $0x98] sm:$0xff]
    %v834 = vld [vmem:[#allocation2 + $0xa0] sm:$0xff]
    %v835 = vld [vmem:[#allocation2 + $0xa8] sm:$0xff]
    %v836 = vld [vmem:[#allocation2 + $0xb0] sm:$0xff]
    %v837 = vld [vmem:[#allocation2 + $0xb8] sm:$0xff]
    %s838 = scalar_lea.vmem %s1, 6
    %v839 = vld [vmem:[%s838] ss:$8 sm:$0x7]
    %v841 = vlaneseq
    %v842 = vshrl.u32 %v841, 7
    %v843 = vsub.s32 0, %v842
    %v844 = vrot.slane %v839, %v843
    %v845 = vlaneseq
    %v846 = vshrl.u32 %v845, 7
    %v847 = vsub.s32 1, %v846
    %v848 = vrot.slane %v839, %v847
    %v849 = vlaneseq
    %v850 = vshrl.u32 %v849, 7
    %v851 = vsub.s32 2, %v850
    %v852 = vrot.slane %v839, %v851
    %v856 = vmul.f32 %v814, %v844
    %v857 = vmul.f32 %v815, %v848
    %v858 = vmul.f32 %v816, %v852
    %v859 = vmul.f32 %v817, %v844
    %v860 = vmul.f32 %v818, %v848
    %v861 = vmul.f32 %v819, %v852
    %v862 = vmul.f32 %v820, %v844
    %v863 = vmul.f32 %v821, %v848
    %v864 = vmul.f32 %v822, %v852
    %v865 = vmul.f32 %v823, %v844
    %v866 = vmul.f32 %v824, %v848
    %v867 = vmul.f32 %v825, %v852
    %v868 = vmul.f32 %v826, %v844
    %v869 = vmul.f32 %v827, %v848
    %v870 = vmul.f32 %v828, %v852
    %v871 = vmul.f32 %v829, %v844
    %v872 = vmul.f32 %v830, %v848
    %v873 = vmul.f32 %v831, %v852
    %v874 = vmul.f32 %v832, %v844
    %v875 = vmul.f32 %v833, %v848
    %v876 = vmul.f32 %v834, %v852
    %v877 = vmul.f32 %v835, %v844
    %v878 = vmul.f32 %v836, %v848
    %v879 = vmul.f32 %v837, %v852
    %s880 = scalar_lea.vmem %s1, 7
    %v881 = vld [vmem:[%s880] ss:$8 sm:$0x7]
    %v883 = vlaneseq
    %v884 = vshrl.u32 %v883, 7
    %v885 = vsub.s32 0, %v884
    %v886 = vrot.slane %v881, %v885
    %v887 = vlaneseq
    %v888 = vshrl.u32 %v887, 7
    %v889 = vsub.s32 1, %v888
    %v890 = vrot.slane %v881, %v889
    %v891 = vlaneseq
    %v892 = vshrl.u32 %v891, 7
    %v893 = vsub.s32 2, %v892
    %v894 = vrot.slane %v881, %v893
    %v898 = vadd.f32 %v856, %v886
    %v899 = vadd.f32 %v857, %v890
    %v900 = vadd.f32 %v858, %v894
    %v901 = vadd.f32 %v859, %v886
    %v902 = vadd.f32 %v860, %v890
    %v903 = vadd.f32 %v861, %v894
    %v904 = vadd.f32 %v862, %v886
    %v905 = vadd.f32 %v863, %v890
    %v906 = vadd.f32 %v864, %v894
    %v907 = vadd.f32 %v865, %v886
    %v908 = vadd.f32 %v866, %v890
    %v909 = vadd.f32 %v867, %v894
    %v910 = vadd.f32 %v868, %v886
    %v911 = vadd.f32 %v869, %v890
    %v912 = vadd.f32 %v870, %v894
    %v913 = vadd.f32 %v871, %v886
    %v914 = vadd.f32 %v872, %v890
    %v915 = vadd.f32 %v873, %v894
    %v916 = vadd.f32 %v874, %v886
    %v917 = vadd.f32 %v875, %v890
    %v918 = vadd.f32 %v876, %v894
    %v919 = vadd.f32 %v877, %v886
    %v920 = vadd.f32 %v878, %v890
    %v921 = vadd.f32 %v879, %v894
    %s922 = scalar_lea.vmem %s1, 24
    %v923 = vld [vmem:[%s922] ss:$8 sm:$0x7]
    %v925 = vlaneseq
    %v926 = vshrl.u32 %v925, 7
    %v927 = vsub.s32 0, %v926
    %v928 = vrot.slane %v923, %v927
    %v929 = vlaneseq
    %v930 = vshrl.u32 %v929, 7
    %v931 = vsub.s32 1, %v930
    %v932 = vrot.slane %v923, %v931
    %v933 = vlaneseq
    %v934 = vshrl.u32 %v933, 7
    %v935 = vsub.s32 2, %v934
    %v936 = vrot.slane %v923, %v935
    %v940 = vmul.f32 %v814, %v928
    %v941 = vmul.f32 %v815, %v932
    %v942 = vmul.f32 %v816, %v936
    %v943 = vmul.f32 %v817, %v928
    %v944 = vmul.f32 %v818, %v932
    %v945 = vmul.f32 %v819, %v936
    %v946 = vmul.f32 %v820, %v928
    %v947 = vmul.f32 %v821, %v932
    %v948 = vmul.f32 %v822, %v936
    %v949 = vmul.f32 %v823, %v928
    %v950 = vmul.f32 %v824, %v932
    %v951 = vmul.f32 %v825, %v936
    %v952 = vmul.f32 %v826, %v928
    %v953 = vmul.f32 %v827, %v932
    %v954 = vmul.f32 %v828, %v936
    %v955 = vmul.f32 %v829, %v928
    %v956 = vmul.f32 %v830, %v932
    %v957 = vmul.f32 %v831, %v936
    %v958 = vmul.f32 %v832, %v928
    %v959 = vmul.f32 %v833, %v932
    %v960 = vmul.f32 %v834, %v936
    %v961 = vmul.f32 %v835, %v928
    %v962 = vmul.f32 %v836, %v932
    %v963 = vmul.f32 %v837, %v936
    %s964 = scalar_lea.vmem %s1, 25
    %v965 = vld [vmem:[%s964] ss:$8 sm:$0x7]
    %v967 = vlaneseq
    %v968 = vshrl.u32 %v967, 7
    %v969 = vsub.s32 0, %v968
    %v970 = vrot.slane %v965, %v969
    %v971 = vlaneseq
    %v972 = vshrl.u32 %v971, 7
    %v973 = vsub.s32 1, %v972
    %v974 = vrot.slane %v965, %v973
    %v975 = vlaneseq
    %v976 = vshrl.u32 %v975, 7
    %v977 = vsub.s32 2, %v976
    %v978 = vrot.slane %v965, %v977
    %v982 = vadd.f32 %v940, %v970
    %v983 = vadd.f32 %v941, %v974
    %v984 = vadd.f32 %v942, %v978
    %v985 = vadd.f32 %v943, %v970
    %v986 = vadd.f32 %v944, %v974
    %v987 = vadd.f32 %v945, %v978
    %v988 = vadd.f32 %v946, %v970
    %v989 = vadd.f32 %v947, %v974
    %v990 = vadd.f32 %v948, %v978
    %v991 = vadd.f32 %v949, %v970
    %v992 = vadd.f32 %v950, %v974
    %v993 = vadd.f32 %v951, %v978
    %v994 = vadd.f32 %v952, %v970
    %v995 = vadd.f32 %v953, %v974
    %v996 = vadd.f32 %v954, %v978
    %v997 = vadd.f32 %v955, %v970
    %v998 = vadd.f32 %v956, %v974
    %v999 = vadd.f32 %v957, %v978
    %v1000 = vadd.f32 %v958, %v970
    %v1001 = vadd.f32 %v959, %v974
    %v1002 = vadd.f32 %v960, %v978
    %v1003 = vadd.f32 %v961, %v970
    %v1004 = vadd.f32 %v962, %v974
    %v1005 = vadd.f32 %v963, %v978
    %v1006 = vld [vmem:[#allocation3] sm:$0xff]
    %v1007 = vld [vmem:[#allocation3 + $0x8] sm:$0xff]
    %v1008 = vld [vmem:[#allocation3 + $0x10] sm:$0xff]
    %v1009 = vld [vmem:[#allocation3 + $0x18] sm:$0xff]
    %v1010 = vld [vmem:[#allocation3 + $0x20] sm:$0xff]
    %v1011 = vld [vmem:[#allocation3 + $0x28] sm:$0xff]
    %v1012 = vld [vmem:[#allocation3 + $0x30] sm:$0xff]
    %v1013 = vld [vmem:[#allocation3 + $0x38] sm:$0xff]
    %v1014 = vld [vmem:[#allocation3 + $0x40] sm:$0xff]
    %v1015 = vld [vmem:[#allocation3 + $0x48] sm:$0xff]
    %v1016 = vld [vmem:[#allocation3 + $0x50] sm:$0xff]
    %v1017 = vld [vmem:[#allocation3 + $0x58] sm:$0xff]
    %v1018 = vld [vmem:[#allocation3 + $0x60] sm:$0xff]
    %v1019 = vld [vmem:[#allocation3 + $0x68] sm:$0xff]
    %v1020 = vld [vmem:[#allocation3 + $0x70] sm:$0xff]
    %v1021 = vld [vmem:[#allocation3 + $0x78] sm:$0xff]
    %v1022 = vld [vmem:[#allocation3 + $0x80] sm:$0xff]
    %v1023 = vld [vmem:[#allocation3 + $0x88] sm:$0xff]
    %v1024 = vld [vmem:[#allocation3 + $0x90] sm:$0xff]
    %v1025 = vld [vmem:[#allocation3 + $0x98] sm:$0xff]
    %v1026 = vld [vmem:[#allocation3 + $0xa0] sm:$0xff]
    %v1027 = vld [vmem:[#allocation3 + $0xa8] sm:$0xff]
    %v1028 = vld [vmem:[#allocation3 + $0xb0] sm:$0xff]
    %v1029 = vld [vmem:[#allocation3 + $0xb8] sm:$0xff]
    %v1030 = vmul.f32 %v898, %v1006
    %v1031 = vmul.f32 %v899, %v1007
    %v1032 = vmul.f32 %v900, %v1008
    %v1033 = vmul.f32 %v901, %v1009
    %v1034 = vmul.f32 %v902, %v1010
    %v1035 = vmul.f32 %v903, %v1011
    %v1036 = vmul.f32 %v904, %v1012
    %v1037 = vmul.f32 %v905, %v1013
    %v1038 = vmul.f32 %v906, %v1014
    %v1039 = vmul.f32 %v907, %v1015
    %v1040 = vmul.f32 %v908, %v1016
    %v1041 = vmul.f32 %v909, %v1017
    %v1042 = vmul.f32 %v910, %v1018
    %v1043 = vmul.f32 %v911, %v1019
    %v1044 = vmul.f32 %v912, %v1020
    %v1045 = vmul.f32 %v913, %v1021
    %v1046 = vmul.f32 %v914, %v1022
    %v1047 = vmul.f32 %v915, %v1023
    %v1048 = vmul.f32 %v916, %v1024
    %v1049 = vmul.f32 %v917, %v1025
    %v1050 = vmul.f32 %v918, %v1026
    %v1051 = vmul.f32 %v919, %v1027
    %v1052 = vmul.f32 %v920, %v1028
    %v1053 = vmul.f32 %v921, %v1029
    %1078 = vrot.lane.b32.xlu0 %v1006, 96
    %v1079 = vpop.permute.xlu0 %1078
    %1080 = vrot.lane.b32.xlu0 %v1007, 96
    %v1081 = vpop.permute.xlu0 %1080
    %1082 = vrot.lane.b32.xlu0 %v1008, 96
    %v1083 = vpop.permute.xlu0 %1082
    %1084 = vrot.lane.b32.xlu0 %v1009, 96
    %v1085 = vpop.permute.xlu0 %1084
    %1086 = vrot.lane.b32.xlu0 %v1010, 96
    %v1087 = vpop.permute.xlu0 %1086
    %1088 = vrot.lane.b32.xlu0 %v1011, 96
    %v1089 = vpop.permute.xlu0 %1088
    %1090 = vrot.lane.b32.xlu0 %v1012, 96
    %v1091 = vpop.permute.xlu0 %1090
    %1092 = vrot.lane.b32.xlu0 %v1013, 96
    %v1093 = vpop.permute.xlu0 %1092
    %1094 = vrot.lane.b32.xlu0 %v1014, 96
    %v1095 = vpop.permute.xlu0 %1094
    %1096 = vrot.lane.b32.xlu0 %v1015, 96
    %v1097 = vpop.permute.xlu0 %1096
    %1098 = vrot.lane.b32.xlu0 %v1016, 96
    %v1099 = vpop.permute.xlu0 %1098
    %1100 = vrot.lane.b32.xlu0 %v1017, 96
    %v1101 = vpop.permute.xlu0 %1100
    %1102 = vrot.lane.b32.xlu0 %v1018, 96
    %v1103 = vpop.permute.xlu0 %1102
    %1104 = vrot.lane.b32.xlu0 %v1019, 96
    %v1105 = vpop.permute.xlu0 %1104
    %1106 = vrot.lane.b32.xlu0 %v1020, 96
    %v1107 = vpop.permute.xlu0 %1106
    %1108 = vrot.lane.b32.xlu0 %v1021, 96
    %v1109 = vpop.permute.xlu0 %1108
    %1110 = vrot.lane.b32.xlu0 %v1022, 96
    %v1111 = vpop.permute.xlu0 %1110
    %1112 = vrot.lane.b32.xlu0 %v1023, 96
    %v1113 = vpop.permute.xlu0 %1112
    %1114 = vrot.lane.b32.xlu0 %v1024, 96
    %v1115 = vpop.permute.xlu0 %1114
    %1116 = vrot.lane.b32.xlu0 %v1025, 96
    %v1117 = vpop.permute.xlu0 %1116
    %1118 = vrot.lane.b32.xlu0 %v1026, 96
    %v1119 = vpop.permute.xlu0 %1118
    %1120 = vrot.lane.b32.xlu0 %v1027, 96
    %v1121 = vpop.permute.xlu0 %1120
    %1122 = vrot.lane.b32.xlu0 %v1028, 96
    %v1123 = vpop.permute.xlu0 %1122
    %1124 = vrot.lane.b32.xlu0 %v1029, 96
    %v1125 = vpop.permute.xlu0 %1124
    %v1126 = vsel %vm366, %v1079, %v1081
    %v1127 = vsel %vm366, %v1081, %v1083
    %v1128 = vsel %vm366, %v1085, %v1087
    %v1129 = vsel %vm366, %v1087, %v1089
    %v1130 = vsel %vm366, %v1091, %v1093
    %v1131 = vsel %vm366, %v1093, %v1095
    %v1132 = vsel %vm366, %v1097, %v1099
    %v1133 = vsel %vm366, %v1099, %v1101
    %v1134 = vsel %vm366, %v1103, %v1105
    %v1135 = vsel %vm366, %v1105, %v1107
    %v1136 = vsel %vm366, %v1109, %v1111
    %v1137 = vsel %vm366, %v1111, %v1113
    %v1138 = vsel %vm366, %v1115, %v1117
    %v1139 = vsel %vm366, %v1117, %v1119
    %v1140 = vsel %vm366, %v1121, %v1123
    %v1141 = vsel %vm366, %v1123, %v1125
    %v1166 = vmul.f32 %v982, %v1126
    %v1167 = vmul.f32 %v983, %v1127
    %v1168 = vmul.f32 %v984, %v1083
    %v1169 = vmul.f32 %v985, %v1128
    %v1170 = vmul.f32 %v986, %v1129
    %v1171 = vmul.f32 %v987, %v1089
    %v1172 = vmul.f32 %v988, %v1130
    %v1173 = vmul.f32 %v989, %v1131
    %v1174 = vmul.f32 %v990, %v1095
    %v1175 = vmul.f32 %v991, %v1132
    %v1176 = vmul.f32 %v992, %v1133
    %v1177 = vmul.f32 %v993, %v1101
    %v1178 = vmul.f32 %v994, %v1134
    %v1179 = vmul.f32 %v995, %v1135
    %v1180 = vmul.f32 %v996, %v1107
    %v1181 = vmul.f32 %v997, %v1136
    %v1182 = vmul.f32 %v998, %v1137
    %v1183 = vmul.f32 %v999, %v1113
    %v1184 = vmul.f32 %v1000, %v1138
    %v1185 = vmul.f32 %v1001, %v1139
    %v1186 = vmul.f32 %v1002, %v1119
    %v1187 = vmul.f32 %v1003, %v1140
    %v1188 = vmul.f32 %v1004, %v1141
    %v1189 = vmul.f32 %v1005, %v1125
    %v1190 = vadd.f32 %v1030, %v1166
    %v1191 = vadd.f32 %v1031, %v1167
    %v1192 = vadd.f32 %v1032, %v1168
    %v1193 = vadd.f32 %v1033, %v1169
    %v1194 = vadd.f32 %v1034, %v1170
    %v1195 = vadd.f32 %v1035, %v1171
    %v1196 = vadd.f32 %v1036, %v1172
    %v1197 = vadd.f32 %v1037, %v1173
    %v1198 = vadd.f32 %v1038, %v1174
    %v1199 = vadd.f32 %v1039, %v1175
    %v1200 = vadd.f32 %v1040, %v1176
    %v1201 = vadd.f32 %v1041, %v1177
    %v1202 = vadd.f32 %v1042, %v1178
    %v1203 = vadd.f32 %v1043, %v1179
    %v1204 = vadd.f32 %v1044, %v1180
    %v1205 = vadd.f32 %v1045, %v1181
    %v1206 = vadd.f32 %v1046, %v1182
    %v1207 = vadd.f32 %v1047, %v1183
    %v1208 = vadd.f32 %v1048, %v1184
    %v1209 = vadd.f32 %v1049, %v1185
    %v1210 = vadd.f32 %v1050, %v1186
    %v1211 = vadd.f32 %v1051, %v1187
    %v1212 = vadd.f32 %v1052, %v1188
    %v1213 = vadd.f32 %v1053, %v1189
    %1214 = vst [vmem:[#allocation3] sm:$0xff] %v1190
    %1215 = vst [vmem:[#allocation3 + $0x8] sm:$0xff] %v1191
    %1216 = vst.msk [vmem:[#allocation3 + $0x10] sm:$0xff] %vm37, %v1192
    %1217 = vst [vmem:[#allocation3 + $0x18] sm:$0xff] %v1193
    %1218 = vst [vmem:[#allocation3 + $0x20] sm:$0xff] %v1194
    %1219 = vst.msk [vmem:[#allocation3 + $0x28] sm:$0xff] %vm37, %v1195
    %1220 = vst [vmem:[#allocation3 + $0x30] sm:$0xff] %v1196
    %1221 = vst [vmem:[#allocation3 + $0x38] sm:$0xff] %v1197
    %1222 = vst.msk [vmem:[#allocation3 + $0x40] sm:$0xff] %vm37, %v1198
    %1223 = vst [vmem:[#allocation3 + $0x48] sm:$0xff] %v1199
    %1224 = vst [vmem:[#allocation3 + $0x50] sm:$0xff] %v1200
    %1225 = vst.msk [vmem:[#allocation3 + $0x58] sm:$0xff] %vm37, %v1201
    %1226 = vst [vmem:[#allocation3 + $0x60] sm:$0xff] %v1202
    %1227 = vst [vmem:[#allocation3 + $0x68] sm:$0xff] %v1203
    %1228 = vst.msk [vmem:[#allocation3 + $0x70] sm:$0xff] %vm37, %v1204
    %1229 = vst [vmem:[#allocation3 + $0x78] sm:$0xff] %v1205
    %1230 = vst [vmem:[#allocation3 + $0x80] sm:$0xff] %v1206
    %1231 = vst.msk [vmem:[#allocation3 + $0x88] sm:$0xff] %vm37, %v1207
    %1232 = vst [vmem:[#allocation3 + $0x90] sm:$0xff] %v1208
    %1233 = vst [vmem:[#allocation3 + $0x98] sm:$0xff] %v1209
    %1234 = vst.msk [vmem:[#allocation3 + $0xa0] sm:$0xff] %vm37, %v1210
    %1235 = vst [vmem:[#allocation3 + $0xa8] sm:$0xff] %v1211
    %1236 = vst [vmem:[#allocation3 + $0xb0] sm:$0xff] %v1212
    %1237 = vst.msk [vmem:[#allocation3 + $0xb8] sm:$0xff] %vm37, %v1213
    %v1238 = vld [vmem:[#allocation2] sm:$0xff]
    %v1239 = vld [vmem:[#allocation2 + $0x8] sm:$0xff]
    %v1240 = vld [vmem:[#allocation2 + $0x18] sm:$0xff]
    %v1241 = vld [vmem:[#allocation2 + $0x20] sm:$0xff]
    %v1242 = vld [vmem:[#allocation2 + $0x30] sm:$0xff]
    %v1243 = vld [vmem:[#allocation2 + $0x38] sm:$0xff]
    %v1244 = vld [vmem:[#allocation2 + $0x48] sm:$0xff]
    %v1245 = vld [vmem:[#allocation2 + $0x50] sm:$0xff]
    %v1246 = vld [vmem:[#allocation2 + $0x60] sm:$0xff]
    %v1247 = vld [vmem:[#allocation2 + $0x68] sm:$0xff]
    %v1248 = vld [vmem:[#allocation2 + $0x78] sm:$0xff]
    %v1249 = vld [vmem:[#allocation2 + $0x80] sm:$0xff]
    %v1250 = vld [vmem:[#allocation2 + $0x90] sm:$0xff]
    %v1251 = vld [vmem:[#allocation2 + $0x98] sm:$0xff]
    %v1252 = vld [vmem:[#allocation2 + $0xa8] sm:$0xff]
    %v1253 = vld [vmem:[#allocation2 + $0xb0] sm:$0xff]
    %s1254 = scalar_lea.vmem %s1, 26
    %v1255 = vld [vmem:[%s1254] ss:$8 sm:$0x3]
    %v1257 = vlaneseq
    %v1258 = vshrl.u32 %v1257, 7
    %v1259 = vsub.s32 0, %v1258
    %v1260 = vrot.slane %v1255, %v1259
    %v1261 = vlaneseq
    %v1262 = vshrl.u32 %v1261, 7
    %v1263 = vsub.s32 1, %v1262
    %v1264 = vrot.slane %v1255, %v1263
    %v1267 = vmul.f32 %v1238, %v1260
    %v1268 = vmul.f32 %v1239, %v1264
    %v1269 = vmul.f32 %v1240, %v1260
    %v1270 = vmul.f32 %v1241, %v1264
    %v1271 = vmul.f32 %v1242, %v1260
    %v1272 = vmul.f32 %v1243, %v1264
    %v1273 = vmul.f32 %v1244, %v1260
    %v1274 = vmul.f32 %v1245, %v1264
    %v1275 = vmul.f32 %v1246, %v1260
    %v1276 = vmul.f32 %v1247, %v1264
    %v1277 = vmul.f32 %v1248, %v1260
    %v1278 = vmul.f32 %v1249, %v1264
    %v1279 = vmul.f32 %v1250, %v1260
    %v1280 = vmul.f32 %v1251, %v1264
    %v1281 = vmul.f32 %v1252, %v1260
    %v1282 = vmul.f32 %v1253, %v1264
    %s1283 = scalar_lea.vmem %s1, 27
    %v1284 = vld [vmem:[%s1283] ss:$8 sm:$0x3]
    %v1286 = vlaneseq
    %v1287 = vshrl.u32 %v1286, 7
    %v1288 = vsub.s32 0, %v1287
    %v1289 = vrot.slane %v1284, %v1288
    %v1290 = vlaneseq
    %v1291 = vshrl.u32 %v1290, 7
    %v1292 = vsub.s32 1, %v1291
    %v1293 = vrot.slane %v1284, %v1292
    %v1296 = vadd.f32 %v1267, %v1289
    %v1297 = vadd.f32 %v1268, %v1293
    %v1298 = vadd.f32 %v1269, %v1289
    %v1299 = vadd.f32 %v1270, %v1293
    %v1300 = vadd.f32 %v1271, %v1289
    %v1301 = vadd.f32 %v1272, %v1293
    %v1302 = vadd.f32 %v1273, %v1289
    %v1303 = vadd.f32 %v1274, %v1293
    %v1304 = vadd.f32 %v1275, %v1289
    %v1305 = vadd.f32 %v1276, %v1293
    %v1306 = vadd.f32 %v1277, %v1289
    %v1307 = vadd.f32 %v1278, %v1293
    %v1308 = vadd.f32 %v1279, %v1289
    %v1309 = vadd.f32 %v1280, %v1293
    %v1310 = vadd.f32 %v1281, %v1289
    %v1311 = vadd.f32 %v1282, %v1293
    %s1312 = scalar_lea.vmem %s1, 28
    %v1313 = vld [vmem:[%s1312] ss:$8 sm:$0x3]
    %v1315 = vlaneseq
    %v1316 = vshrl.u32 %v1315, 7
    %v1317 = vsub.s32 0, %v1316
    %v1318 = vrot.slane %v1313, %v1317
    %v1319 = vlaneseq
    %v1320 = vshrl.u32 %v1319, 7
    %v1321 = vsub.s32 1, %v1320
    %v1322 = vrot.slane %v1313, %v1321
    %v1325 = vmul.f32 %v1238, %v1318
    %v1326 = vmul.f32 %v1239, %v1322
    %v1327 = vmul.f32 %v1240, %v1318
    %v1328 = vmul.f32 %v1241, %v1322
    %v1329 = vmul.f32 %v1242, %v1318
    %v1330 = vmul.f32 %v1243, %v1322
    %v1331 = vmul.f32 %v1244, %v1318
    %v1332 = vmul.f32 %v1245, %v1322
    %v1333 = vmul.f32 %v1246, %v1318
    %v1334 = vmul.f32 %v1247, %v1322
    %v1335 = vmul.f32 %v1248, %v1318
    %v1336 = vmul.f32 %v1249, %v1322
    %v1337 = vmul.f32 %v1250, %v1318
    %v1338 = vmul.f32 %v1251, %v1322
    %v1339 = vmul.f32 %v1252, %v1318
    %v1340 = vmul.f32 %v1253, %v1322
    %s1341 = scalar_lea.vmem %s1, 29
    %v1342 = vld [vmem:[%s1341] ss:$8 sm:$0x3]
    %v1344 = vlaneseq
    %v1345 = vshrl.u32 %v1344, 7
    %v1346 = vsub.s32 0, %v1345
    %v1347 = vrot.slane %v1342, %v1346
    %v1348 = vlaneseq
    %v1349 = vshrl.u32 %v1348, 7
    %v1350 = vsub.s32 1, %v1349
    %v1351 = vrot.slane %v1342, %v1350
    %v1354 = vadd.f32 %v1325, %v1347
    %v1355 = vadd.f32 %v1326, %v1351
    %v1356 = vadd.f32 %v1327, %v1347
    %v1357 = vadd.f32 %v1328, %v1351
    %v1358 = vadd.f32 %v1329, %v1347
    %v1359 = vadd.f32 %v1330, %v1351
    %v1360 = vadd.f32 %v1331, %v1347
    %v1361 = vadd.f32 %v1332, %v1351
    %v1362 = vadd.f32 %v1333, %v1347
    %v1363 = vadd.f32 %v1334, %v1351
    %v1364 = vadd.f32 %v1335, %v1347
    %v1365 = vadd.f32 %v1336, %v1351
    %v1366 = vadd.f32 %v1337, %v1347
    %v1367 = vadd.f32 %v1338, %v1351
    %v1368 = vadd.f32 %v1339, %v1347
    %v1369 = vadd.f32 %v1340, %v1351
    %v1370 = vld [vmem:[#allocation3] sm:$0xff]
    %v1371 = vld [vmem:[#allocation3 + $0x8] sm:$0xff]
    %v1372 = vld [vmem:[#allocation3 + $0x18] sm:$0xff]
    %v1373 = vld [vmem:[#allocation3 + $0x20] sm:$0xff]
    %v1374 = vld [vmem:[#allocation3 + $0x30] sm:$0xff]
    %v1375 = vld [vmem:[#allocation3 + $0x38] sm:$0xff]
    %v1376 = vld [vmem:[#allocation3 + $0x48] sm:$0xff]
    %v1377 = vld [vmem:[#allocation3 + $0x50] sm:$0xff]
    %v1378 = vld [vmem:[#allocation3 + $0x60] sm:$0xff]
    %v1379 = vld [vmem:[#allocation3 + $0x68] sm:$0xff]
    %v1380 = vld [vmem:[#allocation3 + $0x78] sm:$0xff]
    %v1381 = vld [vmem:[#allocation3 + $0x80] sm:$0xff]
    %v1382 = vld [vmem:[#allocation3 + $0x90] sm:$0xff]
    %v1383 = vld [vmem:[#allocation3 + $0x98] sm:$0xff]
    %v1384 = vld [vmem:[#allocation3 + $0xa8] sm:$0xff]
    %v1385 = vld [vmem:[#allocation3 + $0xb0] sm:$0xff]
    %v1386 = vmul.f32 %v1296, %v1370
    %v1387 = vmul.f32 %v1297, %v1371
    %v1388 = vmul.f32 %v1298, %v1372
    %v1389 = vmul.f32 %v1299, %v1373
    %v1390 = vmul.f32 %v1300, %v1374
    %v1391 = vmul.f32 %v1301, %v1375
    %v1392 = vmul.f32 %v1302, %v1376
    %v1393 = vmul.f32 %v1303, %v1377
    %v1394 = vmul.f32 %v1304, %v1378
    %v1395 = vmul.f32 %v1305, %v1379
    %v1396 = vmul.f32 %v1306, %v1380
    %v1397 = vmul.f32 %v1307, %v1381
    %v1398 = vmul.f32 %v1308, %v1382
    %v1399 = vmul.f32 %v1309, %v1383
    %v1400 = vmul.f32 %v1310, %v1384
    %v1401 = vmul.f32 %v1311, %v1385
    %v1402 = vld [vmem:[#allocation3 + $0x10] sm:$0xff]
    %v1403 = vld [vmem:[#allocation3 + $0x28] sm:$0xff]
    %v1404 = vld [vmem:[#allocation3 + $0x40] sm:$0xff]
    %v1405 = vld [vmem:[#allocation3 + $0x58] sm:$0xff]
    %v1406 = vld [vmem:[#allocation3 + $0x70] sm:$0xff]
    %v1407 = vld [vmem:[#allocation3 + $0x88] sm:$0xff]
    %v1408 = vld [vmem:[#allocation3 + $0xa0] sm:$0xff]
    %v1409 = vld [vmem:[#allocation3 + $0xb8] sm:$0xff]
    %1434 = vrot.lane.b32.xlu0 %v1370, 96
    %v1435 = vpop.permute.xlu0 %1434
    %1436 = vrot.lane.b32.xlu0 %v1371, 96
    %v1437 = vpop.permute.xlu0 %1436
    %1438 = vrot.lane.b32.xlu0 %v1402, 96
    %v1439 = vpop.permute.xlu0 %1438
    %1440 = vrot.lane.b32.xlu0 %v1372, 96
    %v1441 = vpop.permute.xlu0 %1440
    %1442 = vrot.lane.b32.xlu0 %v1373, 96
    %v1443 = vpop.permute.xlu0 %1442
    %1444 = vrot.lane.b32.xlu0 %v1403, 96
    %v1445 = vpop.permute.xlu0 %1444
    %1446 = vrot.lane.b32.xlu0 %v1374, 96
    %v1447 = vpop.permute.xlu0 %1446
    %1448 = vrot.lane.b32.xlu0 %v1375, 96
    %v1449 = vpop.permute.xlu0 %1448
    %1450 = vrot.lane.b32.xlu0 %v1404, 96
    %v1451 = vpop.permute.xlu0 %1450
    %1452 = vrot.lane.b32.xlu0 %v1376, 96
    %v1453 = vpop.permute.xlu0 %1452
    %1454 = vrot.lane.b32.xlu0 %v1377, 96
    %v1455 = vpop.permute.xlu0 %1454
    %1456 = vrot.lane.b32.xlu0 %v1405, 96
    %v1457 = vpop.permute.xlu0 %1456
    %1458 = vrot.lane.b32.xlu0 %v1378, 96
    %v1459 = vpop.permute.xlu0 %1458
    %1460 = vrot.lane.b32.xlu0 %v1379, 96
    %v1461 = vpop.permute.xlu0 %1460
    %1462 = vrot.lane.b32.xlu0 %v1406, 96
    %v1463 = vpop.permute.xlu0 %1462
    %1464 = vrot.lane.b32.xlu0 %v1380, 96
    %v1465 = vpop.permute.xlu0 %1464
    %1466 = vrot.lane.b32.xlu0 %v1381, 96
    %v1467 = vpop.permute.xlu0 %1466
    %1468 = vrot.lane.b32.xlu0 %v1407, 96
    %v1469 = vpop.permute.xlu0 %1468
    %1470 = vrot.lane.b32.xlu0 %v1382, 96
    %v1471 = vpop.permute.xlu0 %1470
    %1472 = vrot.lane.b32.xlu0 %v1383, 96
    %v1473 = vpop.permute.xlu0 %1472
    %1474 = vrot.lane.b32.xlu0 %v1408, 96
    %v1475 = vpop.permute.xlu0 %1474
    %1476 = vrot.lane.b32.xlu0 %v1384, 96
    %v1477 = vpop.permute.xlu0 %1476
    %1478 = vrot.lane.b32.xlu0 %v1385, 96
    %v1479 = vpop.permute.xlu0 %1478
    %1480 = vrot.lane.b32.xlu0 %v1409, 96
    %v1481 = vpop.permute.xlu0 %1480
    %v1482 = vsel %vm366, %v1435, %v1437
    %v1483 = vsel %vm366, %v1437, %v1439
    %v1484 = vsel %vm366, %v1441, %v1443
    %v1485 = vsel %vm366, %v1443, %v1445
    %v1486 = vsel %vm366, %v1447, %v1449
    %v1487 = vsel %vm366, %v1449, %v1451
    %v1488 = vsel %vm366, %v1453, %v1455
    %v1489 = vsel %vm366, %v1455, %v1457
    %v1490 = vsel %vm366, %v1459, %v1461
    %v1491 = vsel %vm366, %v1461, %v1463
    %v1492 = vsel %vm366, %v1465, %v1467
    %v1493 = vsel %vm366, %v1467, %v1469
    %v1494 = vsel %vm366, %v1471, %v1473
    %v1495 = vsel %vm366, %v1473, %v1475
    %v1496 = vsel %vm366, %v1477, %v1479
    %v1497 = vsel %vm366, %v1479, %v1481
    %v1514 = vmul.f32 %v1354, %v1482
    %v1515 = vmul.f32 %v1355, %v1483
    %v1516 = vmul.f32 %v1356, %v1484
    %v1517 = vmul.f32 %v1357, %v1485
    %v1518 = vmul.f32 %v1358, %v1486
    %v1519 = vmul.f32 %v1359, %v1487
    %v1520 = vmul.f32 %v1360, %v1488
    %v1521 = vmul.f32 %v1361, %v1489
    %v1522 = vmul.f32 %v1362, %v1490
    %v1523 = vmul.f32 %v1363, %v1491
    %v1524 = vmul.f32 %v1364, %v1492
    %v1525 = vmul.f32 %v1365, %v1493
    %v1526 = vmul.f32 %v1366, %v1494
    %v1527 = vmul.f32 %v1367, %v1495
    %v1528 = vmul.f32 %v1368, %v1496
    %v1529 = vmul.f32 %v1369, %v1497
    %v1530 = vadd.f32 %v1386, %v1514
    %v1531 = vadd.f32 %v1387, %v1515
    %v1532 = vadd.f32 %v1388, %v1516
    %v1533 = vadd.f32 %v1389, %v1517
    %v1534 = vadd.f32 %v1390, %v1518
    %v1535 = vadd.f32 %v1391, %v1519
    %v1536 = vadd.f32 %v1392, %v1520
    %v1537 = vadd.f32 %v1393, %v1521
    %v1538 = vadd.f32 %v1394, %v1522
    %v1539 = vadd.f32 %v1395, %v1523
    %v1540 = vadd.f32 %v1396, %v1524
    %v1541 = vadd.f32 %v1397, %v1525
    %v1542 = vadd.f32 %v1398, %v1526
    %v1543 = vadd.f32 %v1399, %v1527
    %v1544 = vadd.f32 %v1400, %v1528
    %v1545 = vadd.f32 %v1401, %v1529
    %1546 = vst [vmem:[#allocation3] sm:$0xff] %v1530
    %1547 = vst [vmem:[#allocation3 + $0x8] sm:$0xff] %v1531
    %1548 = vst [vmem:[#allocation3 + $0x18] sm:$0xff] %v1532
    %1549 = vst [vmem:[#allocation3 + $0x20] sm:$0xff] %v1533
    %1550 = vst [vmem:[#allocation3 + $0x30] sm:$0xff] %v1534
    %1551 = vst [vmem:[#allocation3 + $0x38] sm:$0xff] %v1535
    %1552 = vst [vmem:[#allocation3 + $0x48] sm:$0xff] %v1536
    %1553 = vst [vmem:[#allocation3 + $0x50] sm:$0xff] %v1537
    %1554 = vst [vmem:[#allocation3 + $0x60] sm:$0xff] %v1538
    %1555 = vst [vmem:[#allocation3 + $0x68] sm:$0xff] %v1539
    %1556 = vst [vmem:[#allocation3 + $0x78] sm:$0xff] %v1540
    %1557 = vst [vmem:[#allocation3 + $0x80] sm:$0xff] %v1541
    %1558 = vst [vmem:[#allocation3 + $0x90] sm:$0xff] %v1542
    %1559 = vst [vmem:[#allocation3 + $0x98] sm:$0xff] %v1543
    %1560 = vst [vmem:[#allocation3 + $0xa8] sm:$0xff] %v1544
    %1561 = vst [vmem:[#allocation3 + $0xb0] sm:$0xff] %v1545
    %v1562 = vsub.f32 0.0, %v29
    %v1563 = vsub.f32 0.0, %v30
    %v1564 = vsub.f32 0.0, %v31
    %v1565 = vsub.f32 0.0, %v32
    %v1566 = vsub.f32 0.0, %v33
    %v1567 = vsub.f32 0.0, %v34
    %v1568 = vsub.f32 0.0, %v35
    %v1569 = vsub.f32 0.0, %v36
    %v1570 = vmul.f32 %v1562, 1.442695
    %v1571 = vpow.pop %v1570
    %v1572 = vmul.f32 %v1563, 1.442695
    %v1573 = vpow.pop %v1572
    %v1574 = vmul.f32 %v1564, 1.442695
    %v1575 = vpow.pop %v1574
    %v1576 = vmul.f32 %v1565, 1.442695
    %v1577 = vpow.pop %v1576
    %v1578 = vmul.f32 %v1566, 1.442695
    %v1579 = vpow.pop %v1578
    %v1580 = vmul.f32 %v1567, 1.442695
    %v1581 = vpow.pop %v1580
    %v1582 = vmul.f32 %v1568, 1.442695
    %v1583 = vpow.pop %v1582
    %v1584 = vmul.f32 %v1569, 1.442695
    %v1585 = vpow.pop %v1584
    %v1586 = vadd.f32 %v1571, 1.0
    %v1587 = vadd.f32 %v1573, 1.0
    %v1588 = vadd.f32 %v1575, 1.0
    %v1589 = vadd.f32 %v1577, 1.0
    %v1590 = vadd.f32 %v1579, 1.0
    %v1591 = vadd.f32 %v1581, 1.0
    %v1592 = vadd.f32 %v1583, 1.0
    %v1593 = vadd.f32 %v1585, 1.0
    %v1594 = vrcp.pop %v1586
    %v1595 = vmul.f32 1.0, %v1594
    %v1596 = vrcp.pop %v1587
    %v1597 = vmul.f32 1.0, %v1596
    %v1598 = vrcp.pop %v1588
    %v1599 = vmul.f32 1.0, %v1598
    %v1600 = vrcp.pop %v1589
    %v1601 = vmul.f32 1.0, %v1600
    %v1602 = vrcp.pop %v1590
    %v1603 = vmul.f32 1.0, %v1602
    %v1604 = vrcp.pop %v1591
    %v1605 = vmul.f32 1.0, %v1604
    %v1606 = vrcp.pop %v1592
    %v1607 = vmul.f32 1.0, %v1606
    %v1608 = vrcp.pop %v1593
    %v1609 = vmul.f32 1.0, %v1608
    %v1610 = vmul.f32 %v29, %v1595
    %v1611 = vmul.f32 %v30, %v1597
    %v1612 = vmul.f32 %v31, %v1599
    %v1613 = vmul.f32 %v32, %v1601
    %v1614 = vmul.f32 %v33, %v1603
    %v1615 = vmul.f32 %v34, %v1605
    %v1616 = vmul.f32 %v35, %v1607
    %v1617 = vmul.f32 %v36, %v1609
    %1618 = vst.msk [vmem:[#allocation3 + $0x10] sm:$0xff] %vm37, %v1610
    %1619 = vst.msk [vmem:[#allocation3 + $0x28] sm:$0xff] %vm37, %v1611
    %1620 = vst.msk [vmem:[#allocation3 + $0x40] sm:$0xff] %vm37, %v1612
    %1621 = vst.msk [vmem:[#allocation3 + $0x58] sm:$0xff] %vm37, %v1613
    %1622 = vst.msk [vmem:[#allocation3 + $0x70] sm:$0xff] %vm37, %v1614
    %1623 = vst.msk [vmem:[#allocation3 + $0x88] sm:$0xff] %vm37, %v1615
    %1624 = vst.msk [vmem:[#allocation3 + $0xa0] sm:$0xff] %vm37, %v1616
    %1625 = vst.msk [vmem:[#allocation3 + $0xb8] sm:$0xff] %vm37, %v1617
    %v1626 = vld [vmem:[#allocation3] sm:$0xff]
    %v1627 = vld [vmem:[#allocation3 + $0x8] sm:$0xff]
    %v1628 = vld [vmem:[#allocation3 + $0x10] sm:$0xff]
    %v1629 = vld [vmem:[#allocation3 + $0x18] sm:$0xff]
    %v1630 = vld [vmem:[#allocation3 + $0x20] sm:$0xff]
    %v1631 = vld [vmem:[#allocation3 + $0x28] sm:$0xff]
    %v1632 = vld [vmem:[#allocation3 + $0x30] sm:$0xff]
    %v1633 = vld [vmem:[#allocation3 + $0x38] sm:$0xff]
    %v1634 = vld [vmem:[#allocation3 + $0x40] sm:$0xff]
    %v1635 = vld [vmem:[#allocation3 + $0x48] sm:$0xff]
    %v1636 = vld [vmem:[#allocation3 + $0x50] sm:$0xff]
    %v1637 = vld [vmem:[#allocation3 + $0x58] sm:$0xff]
    %v1638 = vld [vmem:[#allocation3 + $0x60] sm:$0xff]
    %v1639 = vld [vmem:[#allocation3 + $0x68] sm:$0xff]
    %v1640 = vld [vmem:[#allocation3 + $0x70] sm:$0xff]
    %v1641 = vld [vmem:[#allocation3 + $0x78] sm:$0xff]
    %v1642 = vld [vmem:[#allocation3 + $0x80] sm:$0xff]
    %v1643 = vld [vmem:[#allocation3 + $0x88] sm:$0xff]
    %v1644 = vld [vmem:[#allocation3 + $0x90] sm:$0xff]
    %v1645 = vld [vmem:[#allocation3 + $0x98] sm:$0xff]
    %v1646 = vld [vmem:[#allocation3 + $0xa0] sm:$0xff]
    %v1647 = vld [vmem:[#allocation3 + $0xa8] sm:$0xff]
    %v1648 = vld [vmem:[#allocation3 + $0xb0] sm:$0xff]
    %v1649 = vld [vmem:[#allocation3 + $0xb8] sm:$0xff]
    %v1650 = vld [vmem:[#allocation4] sm:$0xff]
    %v1651 = vld [vmem:[#allocation4 + $0x8] sm:$0xff]
    %v1652 = vld [vmem:[#allocation4 + $0x10] sm:$0xff]
    %v1653 = vld [vmem:[#allocation4 + $0x18] sm:$0xff]
    %v1654 = vld [vmem:[#allocation4 + $0x20] sm:$0xff]
    %v1655 = vld [vmem:[#allocation4 + $0x28] sm:$0xff]
    %v1656 = vld [vmem:[#allocation4 + $0x30] sm:$0xff]
    %v1657 = vld [vmem:[#allocation4 + $0x38] sm:$0xff]
    %v1658 = vld [vmem:[#allocation4 + $0x40] sm:$0xff]
    %v1659 = vld [vmem:[#allocation4 + $0x48] sm:$0xff]
    %v1660 = vld [vmem:[#allocation4 + $0x50] sm:$0xff]
    %v1661 = vld [vmem:[#allocation4 + $0x58] sm:$0xff]
    %v1662 = vld [vmem:[#allocation4 + $0x60] sm:$0xff]
    %v1663 = vld [vmem:[#allocation4 + $0x68] sm:$0xff]
    %v1664 = vld [vmem:[#allocation4 + $0x70] sm:$0xff]
    %v1665 = vld [vmem:[#allocation4 + $0x78] sm:$0xff]
    %v1666 = vld [vmem:[#allocation4 + $0x80] sm:$0xff]
    %v1667 = vld [vmem:[#allocation4 + $0x88] sm:$0xff]
    %v1668 = vld [vmem:[#allocation4 + $0x90] sm:$0xff]
    %v1669 = vld [vmem:[#allocation4 + $0x98] sm:$0xff]
    %v1670 = vld [vmem:[#allocation4 + $0xa0] sm:$0xff]
    %v1671 = vld [vmem:[#allocation4 + $0xa8] sm:$0xff]
    %v1672 = vld [vmem:[#allocation4 + $0xb0] sm:$0xff]
    %v1673 = vld [vmem:[#allocation4 + $0xb8] sm:$0xff]
    %v1674 = vld [vmem:[#allocation4 + $0xc0] sm:$0xff]
    %v1675 = vld [vmem:[#allocation4 + $0xc8] sm:$0xff]
    %v1676 = vld [vmem:[#allocation4 + $0xd0] sm:$0xff]
    %v1677 = vld [vmem:[#allocation4 + $0xd8] sm:$0xff]
    %v1678 = vld [vmem:[#allocation4 + $0xe0] sm:$0xff]
    %v1679 = vld [vmem:[#allocation4 + $0xe8] sm:$0xff]
    %v1680 = vld [vmem:[#allocation4 + $0xf0] sm:$0xff]
    %v1681 = vld [vmem:[#allocation4 + $0xf8] sm:$0xff]
    %v1682 = vld [vmem:[#allocation4 + $0x100] sm:$0xff]
    %v1683 = vld [vmem:[#allocation4 + $0x108] sm:$0xff]
    %v1684 = vld [vmem:[#allocation4 + $0x110] sm:$0xff]
    %v1685 = vld [vmem:[#allocation4 + $0x118] sm:$0xff]
    %v1687 = vsel %vm37, %v1628, 0
    %v1690 = vsel %vm37, %v1631, 0
    %v1693 = vsel %vm37, %v1634, 0
    %v1696 = vsel %vm37, %v1637, 0
    %v1699 = vsel %vm37, %v1640, 0
    %v1702 = vsel %vm37, %v1643, 0
    %v1705 = vsel %vm37, %v1646, 0
    %v1708 = vsel %vm37, %v1649, 0
    %1710 = vmatprep.subr.mxu0 0.0
    %1711 = vmatpush1.msra.mxu0 %v1665
    %1712 = vmatprep.subr.mxu0 0.0
    %1713 = vmatpush1.msra.mxu0 %v1664
    %1714 = vmatprep.subr.mxu0 0.0
    %1715 = vmatpush1.msra.mxu0 %v1663
    %1716 = vmatprep.subr.mxu0 0.0
    %1717 = vmatpush1.msra.mxu0 %v1662
    %1718 = vmatprep.subr.mxu0 0.0
    %1719 = vmatpush1.msra.mxu0 %v1661
    %1720 = vmatprep.subr.mxu0 0.0
    %1721 = vmatpush1.msra.mxu0 %v1660
    %1722 = vmatprep.subr.mxu0 0.0
    %1723 = vmatpush1.msra.mxu0 %v1659
    %1724 = vmatprep.subr.mxu0 0.0
    %1725 = vmatpush1.msra.mxu0 %v1658
    %1726 = vmatprep.subr.mxu0 0.0
    %1727 = vmatpush1.msra.mxu0 %v1657
    %1728 = vmatprep.subr.mxu0 0.0
    %1729 = vmatpush1.msra.mxu0 %v1656
    %1730 = vmatprep.subr.mxu0 0.0
    %1731 = vmatpush1.msra.mxu0 %v1655
    %1732 = vmatprep.subr.mxu0 0.0
    %1733 = vmatpush1.msra.mxu0 %v1654
    %1734 = vmatprep.subr.mxu0 0.0
    %1735 = vmatpush1.msra.mxu0 %v1653
    %1736 = vmatprep.subr.mxu0 0.0
    %1737 = vmatpush1.msra.mxu0 %v1652
    %1738 = vmatprep.subr.mxu0 0.0
    %1739 = vmatpush1.msra.mxu0 %v1651
    %1740 = vmatprep.subr.mxu0 0.0
    %1741 = vmatpush1.msra.mxu0 %v1650
    %1742 = vmatprep.subr.mxu0 0.0
    %1743 = vmatpush2.msra.mxu0 %v1681
    %1744 = vmatprep.subr.mxu0 0.0
    %1745 = vmatpush2.msra.mxu0 %v1680
    %1746 = vmatprep.subr.mxu0 0.0
    %1747 = vmatpush2.msra.mxu0 %v1679
    %1748 = vmatprep.subr.mxu0 0.0
    %1749 = vmatpush2.msra.mxu0 %v1678
    %1750 = vmatprep.subr.mxu0 0.0
    %1751 = vmatpush2.msra.mxu0 %v1677
    %1752 = vmatprep.subr.mxu0 0.0
    %1753 = vmatpush2.msra.mxu0 %v1676
    %1754 = vmatprep.subr.mxu0 0.0
    %1755 = vmatpush2.msra.mxu0 %v1675
    %1756 = vmatprep.subr.mxu0 0.0
    %1757 = vmatpush2.msra.mxu0 %v1674
    %1758 = vmatprep.subr.mxu0 0.0
    %1759 = vmatpush2.msra.mxu0 %v1673
    %1760 = vmatprep.subr.mxu0 0.0
    %1761 = vmatpush2.msra.mxu0 %v1672
    %1762 = vmatprep.subr.mxu0 0.0
    %1763 = vmatpush2.msra.mxu0 %v1671
    %1764 = vmatprep.subr.mxu0 0.0
    %1765 = vmatpush2.msra.mxu0 %v1670
    %1766 = vmatprep.subr.mxu0 0.0
    %1767 = vmatpush2.msra.mxu0 %v1669
    %1768 = vmatprep.subr.mxu0 0.0
    %1769 = vmatpush2.msra.mxu0 %v1668
    %1770 = vmatprep.subr.mxu0 0.0
    %1771 = vmatpush2.msra.mxu0 %v1667
    %1772 = vmatprep.subr.mxu0 0.0
    %1773 = vmatpush2.msra.mxu0 %v1666
    %1774 = vmatprep.mubr.f32.mxu0 %v1627
    %1775 = vmatmul.mubr.f32.gmra.mxu0 %v1626
    %v1776 = vpop.f32.mrf.mxu0
    %v1777 = vadd.f32 0.0, %v1776
    %v1778 = vpop.f32.mrf.mxu0
    %1779 = vmatprep.mubr.f32.mxu0 %v1630
    %1780 = vmatmul.mubr.f32.gmra.mxu0 %v1629
    %v1781 = vpop.f32.mrf.mxu0
    %v1782 = vadd.f32 0.0, %v1781
    %v1783 = vpop.f32.mrf.mxu0
    %1784 = vmatprep.mubr.f32.mxu0 %v1633
    %1785 = vmatmul.mubr.f32.gmra.mxu0 %v1632
    %v1786 = vpop.f32.mrf.mxu0
    %v1787 = vadd.f32 0.0, %v1786
    %v1788 = vpop.f32.mrf.mxu0
    %1789 = vmatprep.mubr.f32.mxu0 %v1636
    %1790 = vmatmul.mubr.f32.gmra.mxu0 %v1635
    %v1791 = vpop.f32.mrf.mxu0
    %v1792 = vadd.f32 0.0, %v1791
    %v1793 = vpop.f32.mrf.mxu0
    %1794 = vmatprep.mubr.f32.mxu0 %v1639
    %1795 = vmatmul.mubr.f32.gmra.mxu0 %v1638
    %v1796 = vpop.f32.mrf.mxu0
    %v1797 = vadd.f32 0.0, %v1796
    %v1798 = vpop.f32.mrf.mxu0
    %1799 = vmatprep.mubr.f32.mxu0 %v1642
    %1800 = vmatmul.mubr.f32.gmra.mxu0 %v1641
    %v1801 = vpop.f32.mrf.mxu0
    %v1802 = vadd.f32 0.0, %v1801
    %v1803 = vpop.f32.mrf.mxu0
    %1804 = vmatprep.mubr.f32.mxu0 %v1645
    %1805 = vmatmul.mubr.f32.gmra.mxu0 %v1644
    %v1806 = vpop.f32.mrf.mxu0
    %v1807 = vadd.f32 0.0, %v1806
    %v1808 = vpop.f32.mrf.mxu0
    %1809 = vmatprep.mubr.f32.mxu0 %v1648
    %1810 = vmatmul.mubr.f32.gmra.mxu0 %v1647
    %v1811 = vpop.f32.mrf.mxu0
    %v1812 = vadd.f32 0.0, %v1811
    %v1813 = vpop.f32.mrf.mxu0
    %1814 = vdwg.mxu0
    %1815 = vmatprep.subr.mxu0 0.0
    %1816 = vmatpush1.msra.mxu0 0.0
    %1817 = vmatprep.subr.mxu0 0.0
    %1818 = vmatpush1.msra.mxu0 0.0
    %1819 = vmatprep.subr.mxu0 0.0
    %1820 = vmatpush1.msra.mxu0 0.0
    %1821 = vmatprep.subr.mxu0 0.0
    %1822 = vmatpush1.msra.mxu0 0.0
    %1823 = vmatprep.subr.mxu0 0.0
    %1824 = vmatpush1.msra.mxu0 0.0
    %1825 = vmatprep.subr.mxu0 0.0
    %1826 = vmatpush1.msra.mxu0 0.0
    %1827 = vmatprep.subr.mxu0 0.0
    %1828 = vmatpush1.msra.mxu0 0.0
    %1829 = vmatprep.subr.mxu0 0.0
    %1830 = vmatpush1.msra.mxu0 0.0
    %1831 = vmatprep.subr.mxu0 0.0
    %1832 = vmatpush1.msra.mxu0 0.0
    %1833 = vmatprep.subr.mxu0 0.0
    %1834 = vmatpush1.msra.mxu0 0.0
    %1835 = vmatprep.subr.mxu0 0.0
    %1836 = vmatpush1.msra.mxu0 0.0
    %1837 = vmatprep.subr.mxu0 0.0
    %1838 = vmatpush1.msra.mxu0 0.0
    %1839 = vmatprep.subr.mxu0 0.0
    %1840 = vmatpush1.msra.mxu0 %v1685
    %1841 = vmatprep.subr.mxu0 0.0
    %1842 = vmatpush1.msra.mxu0 %v1684
    %1843 = vmatprep.subr.mxu0 0.0
    %1844 = vmatpush1.msra.mxu0 %v1683
    %1845 = vmatprep.subr.mxu0 0.0
    %1846 = vmatpush1.msra.mxu0 %v1682
    %1847 = vmatprep.subr.mxu0 0.0
    %1848 = vmatpush2.msra.mxu0 0.0
    %1849 = vmatprep.subr.mxu0 0.0
    %1850 = vmatpush2.msra.mxu0 0.0
    %1851 = vmatprep.subr.mxu0 0.0
    %1852 = vmatpush2.msra.mxu0 0.0
    %1853 = vmatprep.subr.mxu0 0.0
    %1854 = vmatpush2.msra.mxu0 0.0
    %1855 = vmatprep.subr.mxu0 0.0
    %1856 = vmatpush2.msra.mxu0 0.0
    %1857 = vmatprep.subr.mxu0 0.0
    %1858 = vmatpush2.msra.mxu0 0.0
    %1859 = vmatprep.subr.mxu0 0.0
    %1860 = vmatpush2.msra.mxu0 0.0
    %1861 = vmatprep.subr.mxu0 0.0
    %1862 = vmatpush2.msra.mxu0 0.0
    %1863 = vmatprep.subr.mxu0 0.0
    %1864 = vmatpush2.msra.mxu0 0.0
    %1865 = vmatprep.subr.mxu0 0.0
    %1866 = vmatpush2.msra.mxu0 0.0
    %1867 = vmatprep.subr.mxu0 0.0
    %1868 = vmatpush2.msra.mxu0 0.0
    %1869 = vmatprep.subr.mxu0 0.0
    %1870 = vmatpush2.msra.mxu0 0.0
    %1871 = vmatprep.subr.mxu0 0.0
    %1872 = vmatpush2.msra.mxu0 0.0
    %1873 = vmatprep.subr.mxu0 0.0
    %1874 = vmatpush2.msra.mxu0 0.0
    %1875 = vmatprep.subr.mxu0 0.0
    %1876 = vmatpush2.msra.mxu0 0.0
    %1877 = vmatprep.subr.mxu0 0.0
    %1878 = vmatpush2.msra.mxu0 0.0
    %1879 = vmatprep.mubr.f32.mxu0 0.0
    %1880 = vmatmul.mubr.f32.gmra.mxu0 %v1687
    %v1881 = vpop.f32.mrf.mxu0
    %v1882 = vadd.f32 %v1777, %v1881
    %v1883 = vpop.f32.mrf.mxu0
    %1884 = vmatprep.mubr.f32.mxu0 0.0
    %1885 = vmatmul.mubr.f32.gmra.mxu0 %v1690
    %v1886 = vpop.f32.mrf.mxu0
    %v1887 = vadd.f32 %v1782, %v1886
    %v1888 = vpop.f32.mrf.mxu0
    %1889 = vmatprep.mubr.f32.mxu0 0.0
    %1890 = vmatmul.mubr.f32.gmra.mxu0 %v1693
    %v1891 = vpop.f32.mrf.mxu0
    %v1892 = vadd.f32 %v1787, %v1891
    %v1893 = vpop.f32.mrf.mxu0
    %1894 = vmatprep.mubr.f32.mxu0 0.0
    %1895 = vmatmul.mubr.f32.gmra.mxu0 %v1696
    %v1896 = vpop.f32.mrf.mxu0
    %v1897 = vadd.f32 %v1792, %v1896
    %v1898 = vpop.f32.mrf.mxu0
    %1899 = vmatprep.mubr.f32.mxu0 0.0
    %1900 = vmatmul.mubr.f32.gmra.mxu0 %v1699
    %v1901 = vpop.f32.mrf.mxu0
    %v1902 = vadd.f32 %v1797, %v1901
    %v1903 = vpop.f32.mrf.mxu0
    %1904 = vmatprep.mubr.f32.mxu0 0.0
    %1905 = vmatmul.mubr.f32.gmra.mxu0 %v1702
    %v1906 = vpop.f32.mrf.mxu0
    %v1907 = vadd.f32 %v1802, %v1906
    %v1908 = vpop.f32.mrf.mxu0
    %1909 = vmatprep.mubr.f32.mxu0 0.0
    %1910 = vmatmul.mubr.f32.gmra.mxu0 %v1705
    %v1911 = vpop.f32.mrf.mxu0
    %v1912 = vadd.f32 %v1807, %v1911
    %v1913 = vpop.f32.mrf.mxu0
    %1914 = vmatprep.mubr.f32.mxu0 0.0
    %1915 = vmatmul.mubr.f32.gmra.mxu0 %v1708
    %v1916 = vpop.f32.mrf.mxu0
    %v1917 = vadd.f32 %v1812, %v1916
    %v1918 = vpop.f32.mrf.mxu0
    %1919 = vdwg.mxu0
    %1920 = vst [vmem:[#allocation7] sm:$0xff] %v1882
    %1921 = vst [vmem:[#allocation7 + $0x8] sm:$0xff] %v1887
    %1922 = vst [vmem:[#allocation7 + $0x10] sm:$0xff] %v1892
    %1923 = vst [vmem:[#allocation7 + $0x18] sm:$0xff] %v1897
    %1924 = vst [vmem:[#allocation7 + $0x20] sm:$0xff] %v1902
    %1925 = vst [vmem:[#allocation7 + $0x28] sm:$0xff] %v1907
    %1926 = vst [vmem:[#allocation7 + $0x30] sm:$0xff] %v1912
    %1927 = vst [vmem:[#allocation7 + $0x38] sm:$0xff] %v1917
    // Predicated region
    $region18: #{tpu_custom_call.1} parent=1 // pred_check
      _
    $region19: #{tpu_custom_call.1} parent=1 // pred_check_branch
      %1929 = sbr.rel (0) target = $region21
    $region20: #{tpu_custom_call.1} parent=1 // pred_region
      %s1931 = ssub.s32 1024, 1024
      %1932 = vsyncadd [#allocation6], %s1931
      %s1933 = sshll.u32 [#allocation7], 4
      %s1934 = int_to_ptr.vmem [resolvable:$true] %s1933
      %1939 = dma.vmem_to_hbm [thread:$0]  %s1934, 1024, %s3, [#allocation6], 128, 128, 8
    $region21: #{tpu_custom_call.1} parent=1 // pred_fallthru
      _
    // Predicated region
    $region22: #{tpu_custom_call.1} parent=1 // pred_check
      _
    $region23: #{tpu_custom_call.1} parent=1 // pred_check_branch
      %1941 = sbr.rel (0) target = $region25
    $region24: #{tpu_custom_call.1} parent=1 // pred_region
      %1942 = dma.done [#allocation6], 1024
    $region25: #{tpu_custom_call.1} parent=1 // pred_fallthru
      _
    %1943 = vsyncpa [#allocation5], 1
    %1944 = vsyncpa [#allocation6], 1

</llo_original>
